<compile_context>
chip_gen: v5e
topology: v5e:2x2
jax: 0.10.0
libtpu: 0.0.40
codegen_flags: <defaults>
</compile_context>

<pallas_src>
import functools

import jax
import jax.numpy as jnp
from jax.experimental import pallas as pl
from jax.experimental.pallas import tpu as pltpu


# --------------------------------------------------------------------------- in-kernel math
def _gelu_tanh(x):
    """torch F.gelu(x, approximate='tanh'); the tanh lowers to the EUP on TPU so the
    activation chain stays off the (saturating) VALU slots."""
    c = 0.7978845608028654  # sqrt(2/pi)
    return 0.5 * x * (1.0 + jnp.tanh(c * (x + 0.044715 * (x * x * x))))


def _erf_f32(x):
    """Exact-erf rational approximation (matches torch default F.gelu). Kernel-only:
    the divide is an EUP approx reciprocal."""
    alpha = (0.00022905065861350646, 0.0034082910107109506, 0.050955695062380861,
             0.18520832239976145, 1.128379143519084)
    beta = (-1.1791602954361697e-7, 0.000023547966471313185, 0.0010179625278914885,
            0.014070470171167667, 0.11098505178285362, 0.49746925110067538, 1.0)
    x = jnp.clip(x, -4.0, 4.0)
    x2 = x * x
    num = jnp.full_like(x, alpha[0])
    for c in alpha[1:]:
        num = num * x2 + c
    num = num * x
    den = jnp.full_like(x, beta[0])
    for c in beta[1:]:
        den = den * x2 + c
    return num * pl.reciprocal(den, approx=True)


def _gelu_erf(x):
    return x * 0.5 * (1.0 + _erf_f32(x * 0.7071067811865476))


# --------------------------------------------------------------------------- Pallas kernel
def _block_tt_kernel(x_ref, w1_ref, b1_ref, w2t_ref, b2_ref, o_ref, *,
                     k, th, wo, thresh, last, gelu):
    # x_ref  : (hp, wp, cin)      padded NHWC bf16 image, resident per batch element
    # w1_ref : (k*k*cin, cmid)    conv1 taps packed (kh, kw, cin)-major, BN1 scale folded, bf16
    # b1_ref : (1, cmid)          BN1 bias (f32)
    # w2t_ref: (cout, cmid)       conv2 (1x1) weight^T, BN2 scale folded, bf16
    # b2_ref : (cout, 1)          BN2 bias (f32)
    # o_ref  : (cout, rows_pad)   transposed, lane-dense output tile
    i = pl.program_id(1)
    r0 = i * th
    cin = x_ref.shape[-1]
    cmid = w1_ref.shape[-1]
    rows = th * wo
    kkc = k * k * cin

    # conv1 (kxk): one row-slab load per kh; all kw views are derived from the slab and
    # lane-concatenated so the MXU sees one (or k) big-K dot instead of k*k tiny-K dots.
    views = []
    for kh in range(k):
        slab = x_ref[pl.ds(r0 + kh, th), :, :]                      # (th, wp, cin) bf16
        views.append([slab[:, kw:kw + wo, :] for kw in range(k)])   # k x (th, wo, cin)

    if kkc <= 256:
        patch = jnp.concatenate([v for per_kh in views for v in per_kh], axis=-1)
        patch = patch.reshape(rows, kkc)                            # (rows, k*k*cin)
        acc = jnp.dot(patch, w1_ref[...], preferred_element_type=jnp.float32)
    else:
        acc = jnp.zeros((rows, cmid), jnp.float32)
        for kh in range(k):
            p = jnp.concatenate(views[kh], axis=-1).reshape(rows, k * cin)
            acc = acc + jnp.dot(p, w1_ref[kh * k * cin:(kh + 1) * k * cin, :],
                                preferred_element_type=jnp.float32)

    h = acc + b1_ref[...]                    # fused eval-mode BN1 (scale folded into w1)
    h = _gelu_tanh(h) if gelu == "tanh" else _gelu_erf(h)

    # conv2 (1x1) computed transposed so the store block is (cout, rows) -> dense lanes.
    y = jax.lax.dot_general(w2t_ref[...], h.astype(w2t_ref.dtype),
                            dimension_numbers=(((1,), (1,)), ((), ())),
                            preferred_element_type=jnp.float32)     # (cout, rows)
    y = y + b2_ref[...]                      # fused eval-mode BN2 bias

    if last:
        res = jnp.maximum(y, 0.0).astype(o_ref.dtype)   # F.relu path (last=True)
    else:
        res = (y >= thresh).astype(o_ref.dtype)         # Binarize01Act with T == 0

    if rows == o_ref.shape[-1]:
        o_ref[...] = res
    else:
        o_ref[:, :rows] = res                # lane-padded tile; tail columns are sliced off


# --------------------------------------------------------------------------- wrapper
def block_tt_forward(x, params, *, k=3, padding=1, stride=1, T=0.0, eps=1e-5,
                     last=False, gelu="tanh", input_format="NCHW",
                     th=None, max_rows=2048):
    """Eval-mode Block_TT forward (BN uses running statistics; final_mask_noise is None)."""
    assert stride == 1, "only stride=1 (module default) is supported"
    w1 = params["w1"]                              # (cmid, cin, k, k) torch Conv2d layout
    cmid, cin = int(w1.shape[0]), int(w1.shape[1])
    assert w1.shape[2] == w1.shape[3] == k
    w2 = params["w2"]
    assert w2.shape[2] == w2.shape[3] == 1
    w2 = w2[:, :, 0, 0]                            # (cout, cmid)
    cout = int(w2.shape[0])

    if (not last) and float(T) != 0.0:
        # TODO(synk): T != 0 needs Binarize01Act's randomized dead-zone (pltpu.prng_*).
        raise NotImplementedError("Binarize01Act with T != 0 is not implemented")

    if input_format == "NCHW":
        x_nhwc = x.transpose(0, 2, 3, 1)
    elif input_format == "NHWC":                   # producer already channels-last (skips a pass)
        x_nhwc = x
    else:
        raise ValueError(f"unknown input_format {input_format!r}")
    n, h, w = int(x_nhwc.shape[0]), int(x_nhwc.shape[1]), int(x_nhwc.shape[2])
    assert int(x_nhwc.shape[3]) == cin

    hp, wp = h + 2 * padding, w + 2 * padding
    ho, wo = hp - k + 1, wp - k + 1

    # Row-tile height: largest divisor of ho fitting max_rows, preferring lane-dense tiles
    # (th*wo multiple of 128).  Non-dense tiles are padded, not rejected.
    if th is None:
        divs = [t for t in range(1, ho + 1) if ho % t == 0 and t * wo <= max_rows]
        dense = [t for t in divs if (t * wo) % 128 == 0]
        th = max(dense) if dense else (max(divs) if divs else 1)
    assert ho % th == 0, "th must divide the output height"
    rows = th * wo
    rows_pad = pl.cdiv(rows, 128) * 128
    n_tiles = ho // th

    # Single prep pass: bf16 channels-last + zero pad (ConstantPad2d).
    xp = jnp.pad(x_nhwc.astype(jnp.bfloat16),
                 ((0, 0), (padding, padding), (padding, padding), (0, 0)))

    # Fold eval-mode BN into the conv weights (scale) + one per-channel bias each.
    s1 = params["bn1"]["gamma"] * jax.lax.rsqrt(params["bn1"]["var"] + eps)        # (cmid,)
    b1 = (params["bn1"]["beta"] - params["bn1"]["mean"] * s1).reshape(1, cmid).astype(jnp.float32)
    s2 = params["bn2"]["gamma"] * jax.lax.rsqrt(params["bn2"]["var"] + eps)        # (cout,)
    b2 = (params["bn2"]["beta"] - params["bn2"]["mean"] * s2).reshape(cout, 1).astype(jnp.float32)

    # conv1 weights packed flat, (kh, kw, cin)-major -> (k*k*cin, cmid), BN1 scale folded.
    w1m = (w1 * s1[:, None, None, None]).transpose(2, 3, 1, 0).reshape(k * k * cin, cmid)
    w1m = w1m.astype(jnp.bfloat16)
    # conv2 weight transposed (cout, cmid), BN2 scale folded.
    w2t = (w2 * s2[:, None]).astype(jnp.bfloat16)

    out_dtype = jnp.float32 if last else jnp.bfloat16      # {0,1} is exact in bf16
    out_isize = jnp.dtype(out_dtype).itemsize

    cost = pl.CostEstimate(
        flops=int(2 * n * ho * wo * cmid * (k * k * cin + cout)),
        transcendentals=int(n * ho * wo * cmid),
        bytes_accessed=int(xp.size * 2 + w1m.size * 2 + w2t.size * 2 + (cmid + cout) * 4
                           + n * n_tiles * cout * rows_pad * out_isize))

    vmem_est = (2 * hp * wp * cin * 2                       # double-buffered bf16 image
                + 2 * cout * rows_pad * out_isize           # double-buffered output tile
                + w1m.size * 2 + w2t.size * 2
                + rows * (k * k * cin * 2 + 3 * cmid * 4) + cout * rows_pad * 4
                + (4 << 20))
    vmem_limit = int(min(max(vmem_est, 32 << 20), 64 << 20))

    out = pl.pallas_call(
        functools.partial(_block_tt_kernel, k=k, th=th, wo=wo,
                          thresh=0.5 * float(T), last=last, gelu=gelu),
        out_shape=jax.ShapeDtypeStruct((n * n_tiles, cout, rows_pad), out_dtype),
        grid_spec=pltpu.PrefetchScalarGridSpec(
            num_scalar_prefetch=0,
            grid=(n, n_tiles),
            in_specs=[
                # padded NHWC image: indexed by batch only -> DMA'd once per image and kept
                # resident across its row tiles.
                # TODO(synk): for images too large for VMEM (v7x: 64 MiB) switch to an
                #             overlapping (th+k-1)-row band block instead of whole-image.
                pl.BlockSpec((None, hp, wp, cin), lambda b, i: (b, 0, 0, 0)),
                pl.BlockSpec((k * k * cin, cmid), lambda b, i: (0, 0)),   # conv1 packed taps
                pl.BlockSpec((1, cmid), lambda b, i: (0, 0)),             # bn1 bias
                pl.BlockSpec((cout, cmid), lambda b, i: (0, 0)),          # conv2 weight^T
                pl.BlockSpec((cout, 1), lambda b, i: (0, 0)),             # bn2 bias
            ],
            out_specs=pl.BlockSpec((None, cout, rows_pad),
                                   lambda b, i: (b * n_tiles + i, 0, 0)),
        ),
        compiler_params=pltpu.CompilerParams(
            # batch-first megacore split; the row-tile axis stays serial per core so two
            # TensorCores never duplicate the per-image DMA.
            dimension_semantics=("parallel", "arbitrary"),
            vmem_limit_bytes=vmem_limit),
        cost_estimate=cost,
    )(xp, w1m, b1, w2t, b2)

    # (n*n_tiles, cout, rows_pad) -> torch NCHW f32 (cast fuses into the transpose pass).
    out = out[:, :, :rows].reshape(n, n_tiles, cout, th, wo)
    out = out.transpose(0, 2, 1, 3, 4).reshape(n, cout, ho, wo)
    return out.astype(jnp.float32)


# --------------------------------------------------------------------------- pure-JAX reference
def _reference_forward(x_nchw, params, *, k, padding, T, eps):
    """Same-numerics reference (bf16 operands, f32 accumulation, tanh GELU)."""
    cmid = params["w1"].shape[0]
    cout = params["w2"].shape[0]
    s1 = params["bn1"]["gamma"] * jax.lax.rsqrt(params["bn1"]["var"] + eps)
    b1 = params["bn1"]["beta"] - params["bn1"]["mean"] * s1
    s2 = params["bn2"]["gamma"] * jax.lax.rsqrt(params["bn2"]["var"] + eps)
    b2 = params["bn2"]["beta"] - params["bn2"]["mean"] * s2

    xp = jnp.pad(x_nchw.transpose(0, 2, 3, 1).astype(jnp.bfloat16),
                 ((0, 0), (padding, padding), (padding, padding), (0, 0)))
    w1m = (params["w1"] * s1[:, None, None, None]).transpose(2, 3, 1, 0).astype(jnp.bfloat16)
    w2t = (params["w2"][:, :, 0, 0] * s2[:, None]).astype(jnp.bfloat16)

    h1 = jax.lax.conv_general_dilated(
        xp, w1m, window_strides=(1, 1), padding="VALID",
        dimension_numbers=("NHWC", "HWIO", "NHWC"),
        preferred_element_type=jnp.float32) + b1.astype(jnp.float32)
    h1 = _gelu_tanh(h1).astype(jnp.bfloat16)
    y = jnp.einsum("nyxm,om->noyx", h1, w2t, preferred_element_type=jnp.float32)
    y = y + b2.astype(jnp.float32)[None, :, None, None]
    return (y >= 0.5 * T).astype(jnp.float32)


# --------------------------------------------------------------------------- parameter init
def init_params(key, in_planes, out_planes, k=3, t=8):
    cmid = t * in_planes
    ks = jax.random.split(key, 10)
    return {
        "w1": jax.random.normal(ks[0], (cmid, in_planes, k, k), jnp.float32) * 0.2,
        "w2": jax.random.normal(ks[1], (out_planes, cmid, 1, 1), jnp.float32) * 0.2,
        "bn1": {
            "gamma": jax.random.uniform(ks[2], (cmid,), jnp.float32, 0.5, 1.5),
            "beta": jax.random.normal(ks[3], (cmid,), jnp.float32) * 0.1,
            "mean": jax.random.normal(ks[4], (cmid,), jnp.float32) * 0.1,
            "var": jax.random.uniform(ks[5], (cmid,), jnp.float32, 0.5, 1.5),
        },
        "bn2": {
            "gamma": jax.random.uniform(ks[6], (out_planes,), jnp.float32, 0.5, 1.5),
            "beta": jax.random.normal(ks[7], (out_planes,), jnp.float32) * 0.1,
            "mean": jax.random.normal(ks[8], (out_planes,), jnp.float32) * 0.1,
            "var": jax.random.uniform(ks[9], (out_planes,), jnp.float32, 0.5, 1.5),
        },
    }


if __name__ == "__main__":
    in_planes, out_planes, t, ksz, pad = 4, 4, 8, 3, 1
    key = jax.random.PRNGKey(0)
    k_x, k_p = jax.random.split(key)

    # small example input, NCHW like the PyTorch module expects
    x = jax.random.normal(k_x, (2, in_planes, 16, 16), jnp.float32)
    params = init_params(k_p, in_planes, out_planes, k=ksz, t=t)

    out = block_tt_forward(x, params, k=ksz, padding=pad, stride=1, T=0.0)
    out = jax.block_until_ready(out)

    assert out.shape == (2, out_planes, 16, 16), out.shape
    assert out.dtype == jnp.float32
    # Binarize01Act(T=0) output must be exactly {0, 1}
    assert bool(jnp.all((out == 0.0) | (out == 1.0)))

    # Same-numerics pure-JAX reference; allow a tiny mismatch budget for accumulation-order /
    # EUP-tanh rounding of logits sitting exactly at the threshold.
    ref = _reference_forward(x, params, k=ksz, padding=pad, T=0.0, eps=1e-5)
    mismatch = float(jnp.mean(jnp.abs(out - ref)))
    assert mismatch <= 0.02, f"binarized mismatch fraction {mismatch:.4f}"

    print("KERNEL_OK")
</pallas_src>

<mosaic_0001>
module attributes {stable_mosaic.version = 11 : i64} {
  func.func @_block_tt_kernel(%arg0: i32, %arg1: i32, %arg2: memref<1x18x18x4xbf16, #tpu.memory_space<vmem>>, %arg3: memref<36x32xbf16, #tpu.memory_space<vmem>>, %arg4: memref<1x32xf32, #tpu.memory_space<vmem>>, %arg5: memref<4x32xbf16, #tpu.memory_space<vmem>>, %arg6: memref<4x1xf32, #tpu.memory_space<vmem>>, %arg7: memref<1x4x256xbf16, #tpu.memory_space<vmem>>) attributes {dimension_semantics = [#tpu.dimension_semantics<parallel>, #tpu.dimension_semantics<arbitrary>], iteration_bounds = array<i64: 2, 1>, scalar_prefetch = 0 : i64, scratch_operands = 0 : i64, tpu.core_type = #tpu.core_type<tc>, window_params = [{transform_indices = @transform_0, window_bounds = array<i64: 1, 18, 18, 4>}, {pipeline_mode = #tpu.pipeline_mode<synchronous>, transform_indices = @transform_1, window_bounds = array<i64: 36, 32>}, {pipeline_mode = #tpu.pipeline_mode<synchronous>, transform_indices = @transform_2, window_bounds = array<i64: 1, 32>}, {pipeline_mode = #tpu.pipeline_mode<synchronous>, transform_indices = @transform_3, window_bounds = array<i64: 4, 32>}, {pipeline_mode = #tpu.pipeline_mode<synchronous>, transform_indices = @transform_4, window_bounds = array<i64: 4, 1>}, {transform_indices = @transform_5, window_bounds = array<i64: 1, 4, 256>}]} {
    %c16_i32 = arith.constant 16 : i32
    %0 = arith.muli %arg1, %c16_i32 : i32
    %c0_i32 = arith.constant 0 : i32
    %1 = arith.addi %0, %c0_i32 : i32
    %c0 = arith.constant 0 : index
    %2 = arith.index_cast %1 : i32 to index
    %c0_0 = arith.constant 0 : index
    %c0_1 = arith.constant 0 : index
    %3 = vector.load %arg2[%c0, %2, %c0_0, %c0_1] : memref<1x18x18x4xbf16, #tpu.memory_space<vmem>>, vector<1x16x18x4xbf16>
    %4 = vector.shape_cast %3 : vector<1x16x18x4xbf16> to vector<16x18x4xbf16>
    %5 = vector.extract_strided_slice %4 {offsets = [0, 0, 0], sizes = [16, 16, 4], strides = [1, 1, 1]} : vector<16x18x4xbf16> to vector<16x16x4xbf16>
    %6 = vector.extract_strided_slice %4 {offsets = [0, 1, 0], sizes = [16, 16, 4], strides = [1, 1, 1]} : vector<16x18x4xbf16> to vector<16x16x4xbf16>
    %7 = vector.extract_strided_slice %4 {offsets = [0, 2, 0], sizes = [16, 16, 4], strides = [1, 1, 1]} : vector<16x18x4xbf16> to vector<16x16x4xbf16>
    %c1_i32 = arith.constant 1 : i32
    %8 = arith.addi %0, %c1_i32 : i32
    %c0_2 = arith.constant 0 : index
    %9 = arith.index_cast %8 : i32 to index
    %c0_3 = arith.constant 0 : index
    %c0_4 = arith.constant 0 : index
    %10 = vector.load %arg2[%c0_2, %9, %c0_3, %c0_4] : memref<1x18x18x4xbf16, #tpu.memory_space<vmem>>, vector<1x16x18x4xbf16>
    %11 = vector.shape_cast %10 : vector<1x16x18x4xbf16> to vector<16x18x4xbf16>
    %12 = vector.extract_strided_slice %11 {offsets = [0, 0, 0], sizes = [16, 16, 4], strides = [1, 1, 1]} : vector<16x18x4xbf16> to vector<16x16x4xbf16>
    %13 = vector.extract_strided_slice %11 {offsets = [0, 1, 0], sizes = [16, 16, 4], strides = [1, 1, 1]} : vector<16x18x4xbf16> to vector<16x16x4xbf16>
    %14 = vector.extract_strided_slice %11 {offsets = [0, 2, 0], sizes = [16, 16, 4], strides = [1, 1, 1]} : vector<16x18x4xbf16> to vector<16x16x4xbf16>
    %c2_i32 = arith.constant 2 : i32
    %15 = arith.addi %0, %c2_i32 : i32
    %c0_5 = arith.constant 0 : index
    %16 = arith.index_cast %15 : i32 to index
    %c0_6 = arith.constant 0 : index
    %c0_7 = arith.constant 0 : index
    %17 = vector.load %arg2[%c0_5, %16, %c0_6, %c0_7] : memref<1x18x18x4xbf16, #tpu.memory_space<vmem>>, vector<1x16x18x4xbf16>
    %18 = vector.shape_cast %17 : vector<1x16x18x4xbf16> to vector<16x18x4xbf16>
    %19 = vector.extract_strided_slice %18 {offsets = [0, 0, 0], sizes = [16, 16, 4], strides = [1, 1, 1]} : vector<16x18x4xbf16> to vector<16x16x4xbf16>
    %20 = vector.extract_strided_slice %18 {offsets = [0, 1, 0], sizes = [16, 16, 4], strides = [1, 1, 1]} : vector<16x18x4xbf16> to vector<16x16x4xbf16>
    %21 = vector.extract_strided_slice %18 {offsets = [0, 2, 0], sizes = [16, 16, 4], strides = [1, 1, 1]} : vector<16x18x4xbf16> to vector<16x16x4xbf16>
    %22 = tpu.concatenate %5, %6, %7, %12, %13, %14, %19, %20, %21 in 2 : vector<16x16x4xbf16>, vector<16x16x4xbf16>, vector<16x16x4xbf16>, vector<16x16x4xbf16>, vector<16x16x4xbf16>, vector<16x16x4xbf16>, vector<16x16x4xbf16>, vector<16x16x4xbf16>, vector<16x16x4xbf16> -> vector<16x16x36xbf16>
    %23 = vector.shape_cast %22 : vector<16x16x36xbf16> to vector<256x36xbf16>
    %c0_8 = arith.constant 0 : index
    %c0_9 = arith.constant 0 : index
    %24 = vector.load %arg3[%c0_8, %c0_9] : memref<36x32xbf16, #tpu.memory_space<vmem>>, vector<36x32xbf16>
    %cst = arith.constant dense<0.000000e+00> : vector<256x32xf32>
    %25 = tpu.matmul %23, %24, %cst {dimension_numbers = #tpu.dot_dimension_numbers<[1], [0], [0], [1], [0, 0, 1, 1], [], []>} : vector<256x36xbf16>, vector<36x32xbf16>, vector<256x32xf32> -> vector<256x32xf32>
    %c0_10 = arith.constant 0 : index
    %c0_11 = arith.constant 0 : index
    %26 = vector.load %arg4[%c0_10, %c0_11] : memref<1x32xf32, #tpu.memory_space<vmem>>, vector<1x32xf32>
    %27 = vector.broadcast %26 : vector<1x32xf32> to vector<256x32xf32>
    %28 = arith.addf %25, %27 : vector<256x32xf32>
    %cst_12 = arith.constant 5.000000e-01 : f32
    %29 = vector.broadcast %cst_12 : f32 to vector<256x32xf32>
    %30 = arith.mulf %29, %28 : vector<256x32xf32>
    %31 = arith.mulf %28, %28 : vector<256x32xf32>
    %32 = arith.mulf %31, %28 : vector<256x32xf32>
    %cst_13 = arith.constant 4.471500e-02 : f32
    %33 = vector.broadcast %cst_13 : f32 to vector<256x32xf32>
    %34 = arith.mulf %33, %32 : vector<256x32xf32>
    %35 = arith.addf %28, %34 : vector<256x32xf32>
    %cst_14 = arith.constant 0.797884583 : f32
    %36 = vector.broadcast %cst_14 : f32 to vector<256x32xf32>
    %37 = arith.mulf %36, %35 : vector<256x32xf32>
    %38 = math.tanh %37 : vector<256x32xf32>
    %cst_15 = arith.constant 1.000000e+00 : f32
    %39 = vector.broadcast %cst_15 : f32 to vector<256x32xf32>
    %40 = arith.addf %39, %38 : vector<256x32xf32>
    %41 = arith.mulf %30, %40 : vector<256x32xf32>
    %c0_16 = arith.constant 0 : index
    %c0_17 = arith.constant 0 : index
    %42 = vector.load %arg5[%c0_16, %c0_17] : memref<4x32xbf16, #tpu.memory_space<vmem>>, vector<4x32xbf16>
    %43 = arith.truncf %41 : vector<256x32xf32> to vector<256x32xbf16>
    %cst_18 = arith.constant dense<0.000000e+00> : vector<4x256xf32>
    %44 = tpu.matmul %42, %43, %cst_18 {dimension_numbers = #tpu.dot_dimension_numbers<[1], [1], [0], [0], [0, 0, 1, 0], [], []>} : vector<4x32xbf16>, vector<256x32xbf16>, vector<4x256xf32> -> vector<4x256xf32>
    %c0_19 = arith.constant 0 : index
    %c0_20 = arith.constant 0 : index
    %45 = vector.load %arg6[%c0_19, %c0_20] : memref<4x1xf32, #tpu.memory_space<vmem>>, vector<4x1xf32>
    %46 = vector.broadcast %45 : vector<4x1xf32> to vector<4x256xf32>
    %47 = arith.addf %44, %46 : vector<4x256xf32>
    %cst_21 = arith.constant 0.000000e+00 : f32
    %48 = vector.broadcast %cst_21 : f32 to vector<4x256xf32>
    %49 = arith.cmpf oge, %47, %48 : vector<4x256xf32>
    %50 = arith.extui %49 : vector<4x256xi1> to vector<4x256xi32>
    %51 = arith.sitofp %50 : vector<4x256xi32> to vector<4x256xf32>
    %52 = arith.truncf %51 : vector<4x256xf32> to vector<4x256xbf16>
    %c0_22 = arith.constant 0 : index
    %c0_23 = arith.constant 0 : index
    %c0_24 = arith.constant 0 : index
    %53 = vector.load %arg7[%c0_22, %c0_23, %c0_24] : memref<1x4x256xbf16, #tpu.memory_space<vmem>>, vector<1x4x256xbf16>
    %54 = vector.shape_cast %53 : vector<1x4x256xbf16> to vector<4x256xbf16>
    %55 = vector.shape_cast %52 : vector<4x256xbf16> to vector<1x4x256xbf16>
    tpu.vector_store %arg7[%c0_22, %c0_23, %c0_24], %55 {strides = array<i32>} : memref<1x4x256xbf16, #tpu.memory_space<vmem>>, vector<1x4x256xbf16>,
    return
  }
  func.func @transform_0(%arg0: i32, %arg1: i32) -> (i32, i32, i32, i32) {
    %c0_i32 = arith.constant 0 : i32
    %c0_i32_0 = arith.constant 0 : i32
    %c0_i32_1 = arith.constant 0 : i32
    %c0_i32_2 = arith.constant 0 : i32
    return %arg0, %c0_i32, %c0_i32_0, %c0_i32_1 : i32, i32, i32, i32
  }
  func.func @transform_1(%arg0: i32, %arg1: i32) -> (i32, i32) {
    %c0_i32 = arith.constant 0 : i32
    %c0_i32_0 = arith.constant 0 : i32
    %c0_i32_1 = arith.constant 0 : i32
    return %c0_i32, %c0_i32_0 : i32, i32
  }
  func.func @transform_2(%arg0: i32, %arg1: i32) -> (i32, i32) {
    %c0_i32 = arith.constant 0 : i32
    %c0_i32_0 = arith.constant 0 : i32
    %c0_i32_1 = arith.constant 0 : i32
    return %c0_i32, %c0_i32_0 : i32, i32
  }
  func.func @transform_3(%arg0: i32, %arg1: i32) -> (i32, i32) {
    %c0_i32 = arith.constant 0 : i32
    %c0_i32_0 = arith.constant 0 : i32
    %c0_i32_1 = arith.constant 0 : i32
    return %c0_i32, %c0_i32_0 : i32, i32
  }
  func.func @transform_4(%arg0: i32, %arg1: i32) -> (i32, i32) {
    %c0_i32 = arith.constant 0 : i32
    %c0_i32_0 = arith.constant 0 : i32
    %c0_i32_1 = arith.constant 0 : i32
    return %c0_i32, %c0_i32_0 : i32, i32
  }
  func.func @transform_5(%arg0: i32, %arg1: i32) -> (i32, i32, i32) {
    %c1_i32 = arith.constant 1 : i32
    %0 = arith.muli %arg0, %c1_i32 : i32
    %1 = arith.addi %0, %arg1 : i32
    %c0_i32 = arith.constant 0 : i32
    %c0_i32_0 = arith.constant 0 : i32
    %c0_i32_1 = arith.constant 0 : i32
    return %1, %c0_i32, %c0_i32_0 : i32, i32, i32
  }
}

</mosaic_0001>

<llo_original>
// kernel: tpu_custom_call.1
$region0: #{tpu_custom_call.1}
  #allocation0 [shape = 'u32[]', space=smem, size = 0x4, offset = 0x4, fixed_abs, tag = 'smem constant byte address 0x4 - core index']
  #allocation1 [shape = 'u32[72,128]{1,0:T(1,128)}', space=vmem, size = 0x9000, scoped, tag = 'internal scratch']
  %s0 = inlined_call_operand.vmem [shape: bf16[2,18,18,4], index: 0, kind: input, shape index: {}]
  %s1 = inlined_call_operand.vmem [shape: bf16[36,32], index: 1, kind: input, shape index: {}]
  %s2 = inlined_call_operand.vmem [shape: f32[1,32], index: 2, kind: input, shape index: {}]
  %s3 = inlined_call_operand.vmem [shape: bf16[4,32], index: 3, kind: input, shape index: {}]
  %s4 = inlined_call_operand.vmem [shape: f32[4,1], index: 4, kind: input, shape index: {}]
  %s5 = inlined_call_operand.hbm [shape: bf16[2,4,256], index: 5, kind: output, shape index: {}]
  %s6 = sld [smem:[#allocation0]]
  $region53: #{tpu_custom_call.1} parent=0
    _
  %s8 = ssub.s32 1, %s6
  %s9 = scalar_select 0, %s8, %s6
  $region1: #{tpu_custom_call.1} parent=0
    #allocation2 [shape = 'u8[4096]{0}', space=vmem, size = 0x1000, scoped, tag = 'output window, operand 0']
    #allocation3 [shape = 's32[2]{0}', space=sflag, size = 0x8, scoped, tag = 'scoped memory for tpu_custom_call.1']
    %10 = vsyncpa [#allocation3], 0
    %s11 = scalar_lea.sflag [#allocation3], 1
    %12 = vsyncpa %s11, 0
    loop: start=0, step=1, limit=4
    $region2: #{tpu_custom_call.1} parent=1 // loop_pre_header
      _
    $region3: #{tpu_custom_call.1} parent=1 // loop_header
      %s14 = sphi 0, %s18
      %p15 = scmp.ge.s32.totalorder %s14, 4
      %s21 = sphi 0, %s33
      %s22 = sphi 0, %s29
      %s23 = sphi 0, %s21
      %s24 = sphi 0, %s22
      %s25 = sphi 0, %s23
      %s26 = sphi 0, %s24
      %s36 = sphi 0, %s38
      %s39 = sphi 0, %s36
      %s40 = sphi 0, %s39
      %s56 = sphi 0, %s40
      %s60 = sphi 0, %s60
      %s62 = sphi 0, %s60
      %s63 = sphi 0, %s62
      %s77 = sphi 0, %s63
      %s81 = sphi 0, %s81
      %s83 = sphi 0, %s81
      %s84 = sphi 0, %s83
      %s98 = sphi 0, %s84
      %s102 = sphi 0, %s102
      %s104 = sphi 0, %s102
      %s105 = sphi 0, %s104
      %s119 = sphi 0, %s105
      %s123 = sphi 0, %s123
      %s125 = sphi 0, %s123
      %s126 = sphi 0, %s125
      %s140 = sphi 0, %s126
      %s148 = sphi 0, %s150
      %s151 = sphi 0, %s148
      %s152 = sphi 0, %s151
      %s168 = sphi 0, %s152
    $region4: #{tpu_custom_call.1} parent=1 // loop_header_branch
      %17 = sbr.rel (%p15) target = $region8
    $region5: #{tpu_custom_call.1} parent=1 // loop_body
      %s19 = ssub.s32 %s14, 1
      %s20 = ssub.s32 %s14, 2
      %s27 = sadd.s32 1, %s22
      %p28 = scmp.ge.s32.totalorder %s27, 1
      %s29 = scalar_select %p28, 0, %s27
      %s30 = sadd.s32 1, %s21
      %s31 = scalar_select %p28, %s30, %s21
      %p32 = scmp.ge.s32.totalorder %s31, 2
      %s33 = scalar_select %p32, 0, %s31
      %s34 = ssub.s32 %s21, %s33
      %p35 = scmp.eq.s32.totalorder %s34, 0
      %s37 = sadd.s32 %s36, 1
      %s38 = scalar_select %p35, %s36, %s37
      %p41 = pneg %p35
      %p42 = scmp.eq.s32.totalorder %s14, 1
      %p43 = por %p41, %p42
      %p44 = scmp.ne.s32.totalorder %s36, %s39
      %p45 = scmp.eq.s32.totalorder %s14, 0
      %p46 = por %p44, %p45
      %p47 = scmp.ne.s32.totalorder %s36, %s39
      %p48 = scmp.eq.s32.totalorder %s19, 1
      %p49 = por %p47, %p48
      %p50 = scmp.ne.s32.totalorder %s39, %s40
      %p51 = scmp.eq.s32.totalorder %s19, 0
      %p52 = por %p50, %p51
      %p53 = scmp.ne.s32.totalorder %s39, %s40
      %p54 = scmp.eq.s32.totalorder %s20, 1
      %p55 = por %p53, %p54
      %p57 = scmp.ne.s32.totalorder %s40, %s56
      %p58 = scmp.eq.s32.totalorder %s20, 0
      %p59 = por %p57, %p58
      %s61 = sadd.s32 %s60, 1
      %p64 = scmp.eq.s32.totalorder %s14, 1
      %p65 = scmp.ne.s32.totalorder %s60, %s62
      %p66 = scmp.eq.s32.totalorder %s14, 0
      %p67 = por %p65, %p66
      %p68 = scmp.ne.s32.totalorder %s60, %s62
      %p69 = scmp.eq.s32.totalorder %s19, 1
      %p70 = por %p68, %p69
      %p71 = scmp.ne.s32.totalorder %s62, %s63
      %p72 = scmp.eq.s32.totalorder %s19, 0
      %p73 = por %p71, %p72
      %p74 = scmp.ne.s32.totalorder %s62, %s63
      %p75 = scmp.eq.s32.totalorder %s20, 1
      %p76 = por %p74, %p75
      %p78 = scmp.ne.s32.totalorder %s63, %s77
      %p79 = scmp.eq.s32.totalorder %s20, 0
      %p80 = por %p78, %p79
      %s82 = sadd.s32 %s81, 1
      %p85 = scmp.eq.s32.totalorder %s14, 1
      %p86 = scmp.ne.s32.totalorder %s81, %s83
      %p87 = scmp.eq.s32.totalorder %s14, 0
      %p88 = por %p86, %p87
      %p89 = scmp.ne.s32.totalorder %s81, %s83
      %p90 = scmp.eq.s32.totalorder %s19, 1
      %p91 = por %p89, %p90
      %p92 = scmp.ne.s32.totalorder %s83, %s84
      %p93 = scmp.eq.s32.totalorder %s19, 0
      %p94 = por %p92, %p93
      %p95 = scmp.ne.s32.totalorder %s83, %s84
      %p96 = scmp.eq.s32.totalorder %s20, 1
      %p97 = por %p95, %p96
      %p99 = scmp.ne.s32.totalorder %s84, %s98
      %p100 = scmp.eq.s32.totalorder %s20, 0
      %p101 = por %p99, %p100
      %s103 = sadd.s32 %s102, 1
      %p106 = scmp.eq.s32.totalorder %s14, 1
      %p107 = scmp.ne.s32.totalorder %s102, %s104
      %p108 = scmp.eq.s32.totalorder %s14, 0
      %p109 = por %p107, %p108
      %p110 = scmp.ne.s32.totalorder %s102, %s104
      %p111 = scmp.eq.s32.totalorder %s19, 1
      %p112 = por %p110, %p111
      %p113 = scmp.ne.s32.totalorder %s104, %s105
      %p114 = scmp.eq.s32.totalorder %s19, 0
      %p115 = por %p113, %p114
      %p116 = scmp.ne.s32.totalorder %s104, %s105
      %p117 = scmp.eq.s32.totalorder %s20, 1
      %p118 = por %p116, %p117
      %p120 = scmp.ne.s32.totalorder %s105, %s119
      %p121 = scmp.eq.s32.totalorder %s20, 0
      %p122 = por %p120, %p121
      %s124 = sadd.s32 %s123, 1
      %p127 = scmp.eq.s32.totalorder %s14, 1
      %p128 = scmp.ne.s32.totalorder %s123, %s125
      %p129 = scmp.eq.s32.totalorder %s14, 0
      %p130 = por %p128, %p129
      %p131 = scmp.ne.s32.totalorder %s123, %s125
      %p132 = scmp.eq.s32.totalorder %s19, 1
      %p133 = por %p131, %p132
      %p134 = scmp.ne.s32.totalorder %s125, %s126
      %p135 = scmp.eq.s32.totalorder %s19, 0
      %p136 = por %p134, %p135
      %p137 = scmp.ne.s32.totalorder %s125, %s126
      %p138 = scmp.eq.s32.totalorder %s20, 1
      %p139 = por %p137, %p138
      %p141 = scmp.ne.s32.totalorder %s126, %s140
      %p142 = scmp.eq.s32.totalorder %s20, 0
      %p143 = por %p141, %p142
      %s144 = sadd.s32 %s21, %s22
      %s145 = sadd.s32 %s33, %s29
      %s146 = ssub.s32 %s144, %s145
      %p147 = scmp.eq.s32.totalorder %s146, 0
      %s149 = sadd.s32 %s148, 1
      %s150 = scalar_select %p147, %s148, %s149
      %p153 = pneg %p147
      %p154 = scmp.eq.s32.totalorder %s14, 1
      %p155 = por %p153, %p154
      %p156 = scmp.ne.s32.totalorder %s148, %s151
      %p157 = scmp.eq.s32.totalorder %s14, 0
      %p158 = por %p156, %p157
      %p159 = scmp.ne.s32.totalorder %s148, %s151
      %p160 = scmp.eq.s32.totalorder %s19, 1
      %p161 = por %p159, %p160
      %p162 = scmp.ne.s32.totalorder %s151, %s152
      %p163 = scmp.eq.s32.totalorder %s19, 0
      %p164 = por %p162, %p163
      %p165 = scmp.ne.s32.totalorder %s151, %s152
      %p166 = scmp.eq.s32.totalorder %s20, 1
      %p167 = por %p165, %p166
      %p169 = scmp.ne.s32.totalorder %s152, %s168
      %p170 = scmp.eq.s32.totalorder %s20, 0
      %p171 = por %p169, %p170
      %p172 = scmp.le.s32.totalorder 1, %s14
      %p173 = scmp.lt.s32.totalorder %s14, 3
      %p174 = pnand %p172, %p173
      %p175 = pneg %p174
      // Predicated region
      $region9: #{tpu_custom_call.1} parent=5 // pred_check
        _
      $region10: #{tpu_custom_call.1} parent=5 // pred_check_branch
        %177 = sbr.rel (%p174) target = $region12
      $region11: #{tpu_custom_call.1} parent=5 // pred_region
        %s178 = ssub.s32 %s14, 1
        // Predicated region
        $region13: #{tpu_custom_call.1} parent=11 // pred_check
          %p179 = pneg %p73
        $region14: #{tpu_custom_call.1} parent=11 // pred_check_branch
          %181 = sbr.rel (%p179) target = $region16
        $region15: #{tpu_custom_call.1} parent=11 // pred_region
          _
        $region16: #{tpu_custom_call.1} parent=11 // pred_fallthru
          _
        // Predicated region
        $region17: #{tpu_custom_call.1} parent=11 // pred_check
          %p182 = pneg %p94
        $region18: #{tpu_custom_call.1} parent=11 // pred_check_branch
          %184 = sbr.rel (%p182) target = $region20
        $region19: #{tpu_custom_call.1} parent=11 // pred_region
          _
        $region20: #{tpu_custom_call.1} parent=11 // pred_fallthru
          _
        // Predicated region
        $region21: #{tpu_custom_call.1} parent=11 // pred_check
          %p185 = pneg %p115
        $region22: #{tpu_custom_call.1} parent=11 // pred_check_branch
          %187 = sbr.rel (%p185) target = $region24
        $region23: #{tpu_custom_call.1} parent=11 // pred_region
          _
        $region24: #{tpu_custom_call.1} parent=11 // pred_fallthru
          _
        // Predicated region
        $region25: #{tpu_custom_call.1} parent=11 // pred_check
          %p188 = pneg %p136
        $region26: #{tpu_custom_call.1} parent=11 // pred_check_branch
          %190 = sbr.rel (%p188) target = $region28
        $region27: #{tpu_custom_call.1} parent=11 // pred_region
          _
        $region28: #{tpu_custom_call.1} parent=11 // pred_fallthru
          _
      $region12: #{tpu_custom_call.1} parent=5 // pred_fallthru
        _
      %p191 = scmp.lt.s32.totalorder %s14, 2
      // Predicated region
      $region29: #{tpu_custom_call.1} parent=5 // pred_check
        %p192 = pneg %p191
      $region30: #{tpu_custom_call.1} parent=5 // pred_check_branch
        %194 = sbr.rel (%p192) target = $region32
      $region31: #{tpu_custom_call.1} parent=5 // pred_region
        // Predicated region
        $region33: #{tpu_custom_call.1} parent=31 // pred_check
          %p195 = pneg %p46
        $region34: #{tpu_custom_call.1} parent=31 // pred_check_branch
          %197 = sbr.rel (%p195) target = $region36
        $region35: #{tpu_custom_call.1} parent=31 // pred_region
          %p198 = scmp.lt.s32.totalorder %s21, 1
          %s199 = scalar_select %p198, %s21, 1
          %s200 = smul.addr %s199, 54
          %s201 = smul.addr %s200, 4
          %s202 = scalar_lea.vmem %s0, %s201
        $region36: #{tpu_custom_call.1} parent=31 // pred_fallthru
          _
      $region32: #{tpu_custom_call.1} parent=5 // pred_fallthru
        _
      %p203 = scmp.le.s32.totalorder 1, %s14
      %p204 = scmp.lt.s32.totalorder %s14, 3
      %p205 = pnand %p203, %p204
      %p206 = pneg %p205
      // Predicated region
      $region37: #{tpu_custom_call.1} parent=5 // pred_check
        _
      $region38: #{tpu_custom_call.1} parent=5 // pred_check_branch
        %208 = sbr.rel (%p205) target = $region40
      $region39: #{tpu_custom_call.1} parent=5 // pred_region
        %s209 = ssub.s32 %s14, 1
        %p210 = scmp.lt.s32.totalorder %s23, 1
        %s211 = scalar_select %p210, %s23, 1
        %s212 = smul.addr %s211, 54
        %s213 = smul.addr %s212, 4
        %s214 = scalar_lea.vmem %s0, %s213
        %p215 = pneg %p52
        %p216 = pneg %p49
        %p217 = pneg %p73
        %p218 = pneg %p70
        %p219 = pneg %p94
        %p220 = pneg %p91
        %p221 = pneg %p115
        %p222 = pneg %p112
        %p223 = pneg %p136
        %p224 = pneg %p133
        %p225 = pneg %p164
        %p226 = pneg %p161
        %s227 = sand.u32 %s151, 1
        %s228 = scalar_lea.sflag [#allocation3], %s227
        %s229 = sand.u32 %s151, 1
        %s230 = smul.addr %s229, 4
        %s231 = scalar_lea.vmem [#allocation2], %s230
        %p232 = scmp.lt.s32.totalorder %s23, 1
        %s233 = scalar_select %p232, %s23, 1
        %s234 = smul.addr %s233, 54
        %s235 = smul.addr %s234, 4
        %s236 = scalar_lea.vmem %s0, %s235
        %s237 = sadd.s32 %s23, %s24
        %s239 = smul.u32 %s24, 16
        %s240 = smul.u32 %s239, 3
        %s241 = smul.addr %s240, 4
        %s242 = scalar_lea.vmem %s236, %s241
        %v243 = vld [vmem:[%s242] sm:$0xf]
        %v244 = vld [vmem:[%s242 + $0x4] sm:$0xf]
        %v245 = vld [vmem:[%s242 + $0x8] sm:$0x1]
        %v246 = vld [vmem:[%s242 + $0xc] sm:$0xf]
        %v247 = vld [vmem:[%s242 + $0x10] sm:$0xf]
        %v248 = vld [vmem:[%s242 + $0x14] sm:$0x1]
        %v249 = vld [vmem:[%s242 + $0x18] sm:$0xf]
        %v250 = vld [vmem:[%s242 + $0x1c] sm:$0xf]
        %v251 = vld [vmem:[%s242 + $0x20] sm:$0x1]
        %v252 = vld [vmem:[%s242 + $0x24] sm:$0xf]
        %v253 = vld [vmem:[%s242 + $0x28] sm:$0xf]
        %v254 = vld [vmem:[%s242 + $0x2c] sm:$0x1]
        %v255 = vld [vmem:[%s242 + $0x30] sm:$0xf]
        %v256 = vld [vmem:[%s242 + $0x34] sm:$0xf]
        %v257 = vld [vmem:[%s242 + $0x38] sm:$0x1]
        %v258 = vld [vmem:[%s242 + $0x3c] sm:$0xf]
        %v259 = vld [vmem:[%s242 + $0x40] sm:$0xf]
        %v260 = vld [vmem:[%s242 + $0x44] sm:$0x1]
        %v261 = vld [vmem:[%s242 + $0x48] sm:$0xf]
        %v262 = vld [vmem:[%s242 + $0x4c] sm:$0xf]
        %v263 = vld [vmem:[%s242 + $0x50] sm:$0x1]
        %v264 = vld [vmem:[%s242 + $0x54] sm:$0xf]
        %v265 = vld [vmem:[%s242 + $0x58] sm:$0xf]
        %v266 = vld [vmem:[%s242 + $0x5c] sm:$0x1]
        %v267 = vld [vmem:[%s242 + $0x60] sm:$0xf]
        %v268 = vld [vmem:[%s242 + $0x64] sm:$0xf]
        %v269 = vld [vmem:[%s242 + $0x68] sm:$0x1]
        %v270 = vld [vmem:[%s242 + $0x6c] sm:$0xf]
        %v271 = vld [vmem:[%s242 + $0x70] sm:$0xf]
        %v272 = vld [vmem:[%s242 + $0x74] sm:$0x1]
        %v273 = vld [vmem:[%s242 + $0x78] sm:$0xf]
        %v274 = vld [vmem:[%s242 + $0x7c] sm:$0xf]
        %v275 = vld [vmem:[%s242 + $0x80] sm:$0x1]
        %v276 = vld [vmem:[%s242 + $0x84] sm:$0xf]
        %v277 = vld [vmem:[%s242 + $0x88] sm:$0xf]
        %v278 = vld [vmem:[%s242 + $0x8c] sm:$0x1]
        %v279 = vld [vmem:[%s242 + $0x90] sm:$0xf]
        %v280 = vld [vmem:[%s242 + $0x94] sm:$0xf]
        %v281 = vld [vmem:[%s242 + $0x98] sm:$0x1]
        %v282 = vld [vmem:[%s242 + $0x9c] sm:$0xf]
        %v283 = vld [vmem:[%s242 + $0xa0] sm:$0xf]
        %v284 = vld [vmem:[%s242 + $0xa4] sm:$0x1]
        %v285 = vld [vmem:[%s242 + $0xa8] sm:$0xf]
        %v286 = vld [vmem:[%s242 + $0xac] sm:$0xf]
        %v287 = vld [vmem:[%s242 + $0xb0] sm:$0x1]
        %v288 = vld [vmem:[%s242 + $0xb4] sm:$0xf]
        %v289 = vld [vmem:[%s242 + $0xb8] sm:$0xf]
        %v290 = vld [vmem:[%s242 + $0xbc] sm:$0x1]
        %s291 = sadd.s32 %s239, 1
        %s292 = smul.u32 %s291, 3
        %s293 = smul.addr %s292, 4
        %s294 = scalar_lea.vmem %s236, %s293
        %v295 = vld [vmem:[%s294] sm:$0xf]
        %v296 = vld [vmem:[%s294 + $0x4] sm:$0xf]
        %v297 = vld [vmem:[%s294 + $0x8] sm:$0x1]
        %v298 = vld [vmem:[%s294 + $0xc] sm:$0xf]
        %v299 = vld [vmem:[%s294 + $0x10] sm:$0xf]
        %v300 = vld [vmem:[%s294 + $0x14] sm:$0x1]
        %v301 = vld [vmem:[%s294 + $0x18] sm:$0xf]
        %v302 = vld [vmem:[%s294 + $0x1c] sm:$0xf]
        %v303 = vld [vmem:[%s294 + $0x20] sm:$0x1]
        %v304 = vld [vmem:[%s294 + $0x24] sm:$0xf]
        %v305 = vld [vmem:[%s294 + $0x28] sm:$0xf]
        %v306 = vld [vmem:[%s294 + $0x2c] sm:$0x1]
        %v307 = vld [vmem:[%s294 + $0x30] sm:$0xf]
        %v308 = vld [vmem:[%s294 + $0x34] sm:$0xf]
        %v309 = vld [vmem:[%s294 + $0x38] sm:$0x1]
        %v310 = vld [vmem:[%s294 + $0x3c] sm:$0xf]
        %v311 = vld [vmem:[%s294 + $0x40] sm:$0xf]
        %v312 = vld [vmem:[%s294 + $0x44] sm:$0x1]
        %v313 = vld [vmem:[%s294 + $0x48] sm:$0xf]
        %v314 = vld [vmem:[%s294 + $0x4c] sm:$0xf]
        %v315 = vld [vmem:[%s294 + $0x50] sm:$0x1]
        %v316 = vld [vmem:[%s294 + $0x54] sm:$0xf]
        %v317 = vld [vmem:[%s294 + $0x58] sm:$0xf]
        %v318 = vld [vmem:[%s294 + $0x5c] sm:$0x1]
        %v319 = vld [vmem:[%s294 + $0x60] sm:$0xf]
        %v320 = vld [vmem:[%s294 + $0x64] sm:$0xf]
        %v321 = vld [vmem:[%s294 + $0x68] sm:$0x1]
        %v322 = vld [vmem:[%s294 + $0x6c] sm:$0xf]
        %v323 = vld [vmem:[%s294 + $0x70] sm:$0xf]
        %v324 = vld [vmem:[%s294 + $0x74] sm:$0x1]
        %v325 = vld [vmem:[%s294 + $0x78] sm:$0xf]
        %v326 = vld [vmem:[%s294 + $0x7c] sm:$0xf]
        %v327 = vld [vmem:[%s294 + $0x80] sm:$0x1]
        %v328 = vld [vmem:[%s294 + $0x84] sm:$0xf]
        %v329 = vld [vmem:[%s294 + $0x88] sm:$0xf]
        %v330 = vld [vmem:[%s294 + $0x8c] sm:$0x1]
        %v331 = vld [vmem:[%s294 + $0x90] sm:$0xf]
        %v332 = vld [vmem:[%s294 + $0x94] sm:$0xf]
        %v333 = vld [vmem:[%s294 + $0x98] sm:$0x1]
        %v334 = vld [vmem:[%s294 + $0x9c] sm:$0xf]
        %v335 = vld [vmem:[%s294 + $0xa0] sm:$0xf]
        %v336 = vld [vmem:[%s294 + $0xa4] sm:$0x1]
        %v337 = vld [vmem:[%s294 + $0xa8] sm:$0xf]
        %v338 = vld [vmem:[%s294 + $0xac] sm:$0xf]
        %v339 = vld [vmem:[%s294 + $0xb0] sm:$0x1]
        %v340 = vld [vmem:[%s294 + $0xb4] sm:$0xf]
        %v341 = vld [vmem:[%s294 + $0xb8] sm:$0xf]
        %v342 = vld [vmem:[%s294 + $0xbc] sm:$0x1]
        %s343 = sadd.s32 %s239, 2
        %s344 = smul.u32 %s343, 3
        %s345 = smul.addr %s344, 4
        %s346 = scalar_lea.vmem %s236, %s345
        %v347 = vld [vmem:[%s346] sm:$0xf]
        %v348 = vld [vmem:[%s346 + $0x4] sm:$0xf]
        %v349 = vld [vmem:[%s346 + $0x8] sm:$0x1]
        %v350 = vld [vmem:[%s346 + $0xc] sm:$0xf]
        %v351 = vld [vmem:[%s346 + $0x10] sm:$0xf]
        %v352 = vld [vmem:[%s346 + $0x14] sm:$0x1]
        %v353 = vld [vmem:[%s346 + $0x18] sm:$0xf]
        %v354 = vld [vmem:[%s346 + $0x1c] sm:$0xf]
        %v355 = vld [vmem:[%s346 + $0x20] sm:$0x1]
        %v356 = vld [vmem:[%s346 + $0x24] sm:$0xf]
        %v357 = vld [vmem:[%s346 + $0x28] sm:$0xf]
        %v358 = vld [vmem:[%s346 + $0x2c] sm:$0x1]
        %v359 = vld [vmem:[%s346 + $0x30] sm:$0xf]
        %v360 = vld [vmem:[%s346 + $0x34] sm:$0xf]
        %v361 = vld [vmem:[%s346 + $0x38] sm:$0x1]
        %v362 = vld [vmem:[%s346 + $0x3c] sm:$0xf]
        %v363 = vld [vmem:[%s346 + $0x40] sm:$0xf]
        %v364 = vld [vmem:[%s346 + $0x44] sm:$0x1]
        %v365 = vld [vmem:[%s346 + $0x48] sm:$0xf]
        %v366 = vld [vmem:[%s346 + $0x4c] sm:$0xf]
        %v367 = vld [vmem:[%s346 + $0x50] sm:$0x1]
        %v368 = vld [vmem:[%s346 + $0x54] sm:$0xf]
        %v369 = vld [vmem:[%s346 + $0x58] sm:$0xf]
        %v370 = vld [vmem:[%s346 + $0x5c] sm:$0x1]
        %v371 = vld [vmem:[%s346 + $0x60] sm:$0xf]
        %v372 = vld [vmem:[%s346 + $0x64] sm:$0xf]
        %v373 = vld [vmem:[%s346 + $0x68] sm:$0x1]
        %v374 = vld [vmem:[%s346 + $0x6c] sm:$0xf]
        %v375 = vld [vmem:[%s346 + $0x70] sm:$0xf]
        %v376 = vld [vmem:[%s346 + $0x74] sm:$0x1]
        %v377 = vld [vmem:[%s346 + $0x78] sm:$0xf]
        %v378 = vld [vmem:[%s346 + $0x7c] sm:$0xf]
        %v379 = vld [vmem:[%s346 + $0x80] sm:$0x1]
        %v380 = vld [vmem:[%s346 + $0x84] sm:$0xf]
        %v381 = vld [vmem:[%s346 + $0x88] sm:$0xf]
        %v382 = vld [vmem:[%s346 + $0x8c] sm:$0x1]
        %v383 = vld [vmem:[%s346 + $0x90] sm:$0xf]
        %v384 = vld [vmem:[%s346 + $0x94] sm:$0xf]
        %v385 = vld [vmem:[%s346 + $0x98] sm:$0x1]
        %v386 = vld [vmem:[%s346 + $0x9c] sm:$0xf]
        %v387 = vld [vmem:[%s346 + $0xa0] sm:$0xf]
        %v388 = vld [vmem:[%s346 + $0xa4] sm:$0x1]
        %v389 = vld [vmem:[%s346 + $0xa8] sm:$0xf]
        %v390 = vld [vmem:[%s346 + $0xac] sm:$0xf]
        %v391 = vld [vmem:[%s346 + $0xb0] sm:$0x1]
        %v392 = vld [vmem:[%s346 + $0xb4] sm:$0xf]
        %v393 = vld [vmem:[%s346 + $0xb8] sm:$0xf]
        %v394 = vld [vmem:[%s346 + $0xbc] sm:$0x1]
        %v427 = vunpack.c.l.b16 %v243
        %v428 = vunpack.c.l.b16 %v244
        %v429 = vunpack.c.l.b16 %v246
        %v430 = vunpack.c.l.b16 %v247
        %v431 = vunpack.c.l.b16 %v249
        %v432 = vunpack.c.l.b16 %v250
        %v433 = vunpack.c.l.b16 %v252
        %v434 = vunpack.c.l.b16 %v253
        %v435 = vunpack.c.l.b16 %v255
        %v436 = vunpack.c.l.b16 %v256
        %v437 = vunpack.c.l.b16 %v258
        %v438 = vunpack.c.l.b16 %v259
        %v439 = vunpack.c.l.b16 %v261
        %v440 = vunpack.c.l.b16 %v262
        %v441 = vunpack.c.l.b16 %v264
        %v442 = vunpack.c.l.b16 %v265
        %v443 = vunpack.c.l.b16 %v267
        %v444 = vunpack.c.l.b16 %v268
        %v445 = vunpack.c.l.b16 %v270
        %v446 = vunpack.c.l.b16 %v271
        %v447 = vunpack.c.l.b16 %v273
        %v448 = vunpack.c.l.b16 %v274
        %v449 = vunpack.c.l.b16 %v276
        %v450 = vunpack.c.l.b16 %v277
        %v451 = vunpack.c.l.b16 %v279
        %v452 = vunpack.c.l.b16 %v280
        %v453 = vunpack.c.l.b16 %v282
        %v454 = vunpack.c.l.b16 %v283
        %v455 = vunpack.c.l.b16 %v285
        %v456 = vunpack.c.l.b16 %v286
        %v457 = vunpack.c.l.b16 %v288
        %v458 = vunpack.c.l.b16 %v289
        %v459 = vpack.c.b16 %v428, %v427
        %v460 = vpack.c.b16 %v430, %v429
        %v461 = vpack.c.b16 %v432, %v431
        %v462 = vpack.c.b16 %v434, %v433
        %v463 = vpack.c.b16 %v436, %v435
        %v464 = vpack.c.b16 %v438, %v437
        %v465 = vpack.c.b16 %v440, %v439
        %v466 = vpack.c.b16 %v442, %v441
        %v467 = vpack.c.b16 %v444, %v443
        %v468 = vpack.c.b16 %v446, %v445
        %v469 = vpack.c.b16 %v448, %v447
        %v470 = vpack.c.b16 %v450, %v449
        %v471 = vpack.c.b16 %v452, %v451
        %v472 = vpack.c.b16 %v454, %v453
        %v473 = vpack.c.b16 %v456, %v455
        %v474 = vpack.c.b16 %v458, %v457
        %v491 = vunpack.c.l.b16 %v245
        %v492 = vunpack.c.l.b16 %v248
        %v493 = vunpack.c.l.b16 %v251
        %v494 = vunpack.c.l.b16 %v254
        %v495 = vunpack.c.l.b16 %v257
        %v496 = vunpack.c.l.b16 %v260
        %v497 = vunpack.c.l.b16 %v263
        %v498 = vunpack.c.l.b16 %v266
        %v499 = vunpack.c.l.b16 %v269
        %v500 = vunpack.c.l.b16 %v272
        %v501 = vunpack.c.l.b16 %v275
        %v502 = vunpack.c.l.b16 %v278
        %v503 = vunpack.c.l.b16 %v281
        %v504 = vunpack.c.l.b16 %v284
        %v505 = vunpack.c.l.b16 %v287
        %v506 = vunpack.c.l.b16 %v290
        %v507 = vpack.c.b16 %v491, %v491
        %v508 = vpack.c.b16 %v492, %v492
        %v509 = vpack.c.b16 %v493, %v493
        %v510 = vpack.c.b16 %v494, %v494
        %v511 = vpack.c.b16 %v495, %v495
        %v512 = vpack.c.b16 %v496, %v496
        %v513 = vpack.c.b16 %v497, %v497
        %v514 = vpack.c.b16 %v498, %v498
        %v515 = vpack.c.b16 %v499, %v499
        %v516 = vpack.c.b16 %v500, %v500
        %v517 = vpack.c.b16 %v501, %v501
        %v518 = vpack.c.b16 %v502, %v502
        %v519 = vpack.c.b16 %v503, %v503
        %v520 = vpack.c.b16 %v504, %v504
        %v521 = vpack.c.b16 %v505, %v505
        %v522 = vpack.c.b16 %v506, %v506
        %vm523 = vsmask.f32 7424
        %v525 = vshrl.u32 %v459, 16
        %v527 = vshll.u32 %v459, 16
        %v529 = vrot.slane %v527, 1
        %v530 = vor.u32 %v525, %v529
        %v532 = vshll.u32 %v507, 16
        %v534 = vrot.slane %v532, 1
        %v535 = vsel %vm523, %v530, %v534
        %v537 = vshrl.u32 %v460, 16
        %v539 = vshll.u32 %v460, 16
        %v541 = vrot.slane %v539, 1
        %v542 = vor.u32 %v537, %v541
        %v544 = vshll.u32 %v508, 16
        %v546 = vrot.slane %v544, 1
        %v547 = vsel %vm523, %v542, %v546
        %v549 = vshrl.u32 %v461, 16
        %v551 = vshll.u32 %v461, 16
        %v553 = vrot.slane %v551, 1
        %v554 = vor.u32 %v549, %v553
        %v556 = vshll.u32 %v509, 16
        %v558 = vrot.slane %v556, 1
        %v559 = vsel %vm523, %v554, %v558
        %v561 = vshrl.u32 %v462, 16
        %v563 = vshll.u32 %v462, 16
        %v565 = vrot.slane %v563, 1
        %v566 = vor.u32 %v561, %v565
        %v568 = vshll.u32 %v510, 16
        %v570 = vrot.slane %v568, 1
        %v571 = vsel %vm523, %v566, %v570
        %v573 = vshrl.u32 %v463, 16
        %v575 = vshll.u32 %v463, 16
        %v577 = vrot.slane %v575, 1
        %v578 = vor.u32 %v573, %v577
        %v580 = vshll.u32 %v511, 16
        %v582 = vrot.slane %v580, 1
        %v583 = vsel %vm523, %v578, %v582
        %v585 = vshrl.u32 %v464, 16
        %v587 = vshll.u32 %v464, 16
        %v589 = vrot.slane %v587, 1
        %v590 = vor.u32 %v585, %v589
        %v592 = vshll.u32 %v512, 16
        %v594 = vrot.slane %v592, 1
        %v595 = vsel %vm523, %v590, %v594
        %v597 = vshrl.u32 %v465, 16
        %v599 = vshll.u32 %v465, 16
        %v601 = vrot.slane %v599, 1
        %v602 = vor.u32 %v597, %v601
        %v604 = vshll.u32 %v513, 16
        %v606 = vrot.slane %v604, 1
        %v607 = vsel %vm523, %v602, %v606
        %v609 = vshrl.u32 %v466, 16
        %v611 = vshll.u32 %v466, 16
        %v613 = vrot.slane %v611, 1
        %v614 = vor.u32 %v609, %v613
        %v616 = vshll.u32 %v514, 16
        %v618 = vrot.slane %v616, 1
        %v619 = vsel %vm523, %v614, %v618
        %v621 = vshrl.u32 %v467, 16
        %v623 = vshll.u32 %v467, 16
        %v625 = vrot.slane %v623, 1
        %v626 = vor.u32 %v621, %v625
        %v628 = vshll.u32 %v515, 16
        %v630 = vrot.slane %v628, 1
        %v631 = vsel %vm523, %v626, %v630
        %v633 = vshrl.u32 %v468, 16
        %v635 = vshll.u32 %v468, 16
        %v637 = vrot.slane %v635, 1
        %v638 = vor.u32 %v633, %v637
        %v640 = vshll.u32 %v516, 16
        %v642 = vrot.slane %v640, 1
        %v643 = vsel %vm523, %v638, %v642
        %v645 = vshrl.u32 %v469, 16
        %v647 = vshll.u32 %v469, 16
        %v649 = vrot.slane %v647, 1
        %v650 = vor.u32 %v645, %v649
        %v652 = vshll.u32 %v517, 16
        %v654 = vrot.slane %v652, 1
        %v655 = vsel %vm523, %v650, %v654
        %v657 = vshrl.u32 %v470, 16
        %v659 = vshll.u32 %v470, 16
        %v661 = vrot.slane %v659, 1
        %v662 = vor.u32 %v657, %v661
        %v664 = vshll.u32 %v518, 16
        %v666 = vrot.slane %v664, 1
        %v667 = vsel %vm523, %v662, %v666
        %v669 = vshrl.u32 %v471, 16
        %v671 = vshll.u32 %v471, 16
        %v673 = vrot.slane %v671, 1
        %v674 = vor.u32 %v669, %v673
        %v676 = vshll.u32 %v519, 16
        %v678 = vrot.slane %v676, 1
        %v679 = vsel %vm523, %v674, %v678
        %v681 = vshrl.u32 %v472, 16
        %v683 = vshll.u32 %v472, 16
        %v685 = vrot.slane %v683, 1
        %v686 = vor.u32 %v681, %v685
        %v688 = vshll.u32 %v520, 16
        %v690 = vrot.slane %v688, 1
        %v691 = vsel %vm523, %v686, %v690
        %v693 = vshrl.u32 %v473, 16
        %v695 = vshll.u32 %v473, 16
        %v697 = vrot.slane %v695, 1
        %v698 = vor.u32 %v693, %v697
        %v700 = vshll.u32 %v521, 16
        %v702 = vrot.slane %v700, 1
        %v703 = vsel %vm523, %v698, %v702
        %v705 = vshrl.u32 %v474, 16
        %v707 = vshll.u32 %v474, 16
        %v709 = vrot.slane %v707, 1
        %v710 = vor.u32 %v705, %v709
        %v712 = vshll.u32 %v522, 16
        %v714 = vrot.slane %v712, 1
        %v715 = vsel %vm523, %v710, %v714
        %716 = vrot.lane.b32.xlu0 %v535, 4
        %v717 = vpop.permute.xlu0 %716
        %718 = vrot.lane.b32.xlu0 %v547, 4
        %v719 = vpop.permute.xlu0 %718
        %720 = vrot.lane.b32.xlu0 %v559, 4
        %v721 = vpop.permute.xlu0 %720
        %722 = vrot.lane.b32.xlu0 %v571, 4
        %v723 = vpop.permute.xlu0 %722
        %724 = vrot.lane.b32.xlu0 %v583, 4
        %v725 = vpop.permute.xlu0 %724
        %726 = vrot.lane.b32.xlu0 %v595, 4
        %v727 = vpop.permute.xlu0 %726
        %728 = vrot.lane.b32.xlu0 %v607, 4
        %v729 = vpop.permute.xlu0 %728
        %730 = vrot.lane.b32.xlu0 %v619, 4
        %v731 = vpop.permute.xlu0 %730
        %732 = vrot.lane.b32.xlu0 %v631, 4
        %v733 = vpop.permute.xlu0 %732
        %734 = vrot.lane.b32.xlu0 %v643, 4
        %v735 = vpop.permute.xlu0 %734
        %736 = vrot.lane.b32.xlu0 %v655, 4
        %v737 = vpop.permute.xlu0 %736
        %738 = vrot.lane.b32.xlu0 %v667, 4
        %v739 = vpop.permute.xlu0 %738
        %740 = vrot.lane.b32.xlu0 %v679, 4
        %v741 = vpop.permute.xlu0 %740
        %742 = vrot.lane.b32.xlu0 %v691, 4
        %v743 = vpop.permute.xlu0 %742
        %744 = vrot.lane.b32.xlu0 %v703, 4
        %v745 = vpop.permute.xlu0 %744
        %746 = vrot.lane.b32.xlu0 %v715, 4
        %v747 = vpop.permute.xlu0 %746
        %vm748 = vcmask 1046528
        %v749 = vrot.slane %v459, 1
        %v750 = vrot.slane %v507, 1
        %v751 = vsel %vm748, %v749, %v750
        %v752 = vrot.slane %v460, 1
        %v753 = vrot.slane %v508, 1
        %v754 = vsel %vm748, %v752, %v753
        %v755 = vrot.slane %v461, 1
        %v756 = vrot.slane %v509, 1
        %v757 = vsel %vm748, %v755, %v756
        %v758 = vrot.slane %v462, 1
        %v759 = vrot.slane %v510, 1
        %v760 = vsel %vm748, %v758, %v759
        %v761 = vrot.slane %v463, 1
        %v762 = vrot.slane %v511, 1
        %v763 = vsel %vm748, %v761, %v762
        %v764 = vrot.slane %v464, 1
        %v765 = vrot.slane %v512, 1
        %v766 = vsel %vm748, %v764, %v765
        %v767 = vrot.slane %v465, 1
        %v768 = vrot.slane %v513, 1
        %v769 = vsel %vm748, %v767, %v768
        %v770 = vrot.slane %v466, 1
        %v771 = vrot.slane %v514, 1
        %v772 = vsel %vm748, %v770, %v771
        %v773 = vrot.slane %v467, 1
        %v774 = vrot.slane %v515, 1
        %v775 = vsel %vm748, %v773, %v774
        %v776 = vrot.slane %v468, 1
        %v777 = vrot.slane %v516, 1
        %v778 = vsel %vm748, %v776, %v777
        %v779 = vrot.slane %v469, 1
        %v780 = vrot.slane %v517, 1
        %v781 = vsel %vm748, %v779, %v780
        %v782 = vrot.slane %v470, 1
        %v783 = vrot.slane %v518, 1
        %v784 = vsel %vm748, %v782, %v783
        %v785 = vrot.slane %v471, 1
        %v786 = vrot.slane %v519, 1
        %v787 = vsel %vm748, %v785, %v786
        %v788 = vrot.slane %v472, 1
        %v789 = vrot.slane %v520, 1
        %v790 = vsel %vm748, %v788, %v789
        %v791 = vrot.slane %v473, 1
        %v792 = vrot.slane %v521, 1
        %v793 = vsel %vm748, %v791, %v792
        %v794 = vrot.slane %v474, 1
        %v795 = vrot.slane %v522, 1
        %v796 = vsel %vm748, %v794, %v795
        %797 = vrot.lane.b32.xlu0 %v751, 8
        %v798 = vpop.permute.xlu0 %797
        %799 = vrot.lane.b32.xlu0 %v754, 8
        %v800 = vpop.permute.xlu0 %799
        %801 = vrot.lane.b32.xlu0 %v757, 8
        %v802 = vpop.permute.xlu0 %801
        %803 = vrot.lane.b32.xlu0 %v760, 8
        %v804 = vpop.permute.xlu0 %803
        %805 = vrot.lane.b32.xlu0 %v763, 8
        %v806 = vpop.permute.xlu0 %805
        %807 = vrot.lane.b32.xlu0 %v766, 8
        %v808 = vpop.permute.xlu0 %807
        %809 = vrot.lane.b32.xlu0 %v769, 8
        %v810 = vpop.permute.xlu0 %809
        %811 = vrot.lane.b32.xlu0 %v772, 8
        %v812 = vpop.permute.xlu0 %811
        %813 = vrot.lane.b32.xlu0 %v775, 8
        %v814 = vpop.permute.xlu0 %813
        %815 = vrot.lane.b32.xlu0 %v778, 8
        %v816 = vpop.permute.xlu0 %815
        %817 = vrot.lane.b32.xlu0 %v781, 8
        %v818 = vpop.permute.xlu0 %817
        %819 = vrot.lane.b32.xlu0 %v784, 8
        %v820 = vpop.permute.xlu0 %819
        %821 = vrot.lane.b32.xlu0 %v787, 8
        %v822 = vpop.permute.xlu0 %821
        %823 = vrot.lane.b32.xlu0 %v790, 8
        %v824 = vpop.permute.xlu0 %823
        %825 = vrot.lane.b32.xlu0 %v793, 8
        %v826 = vpop.permute.xlu0 %825
        %827 = vrot.lane.b32.xlu0 %v796, 8
        %v828 = vpop.permute.xlu0 %827
        %v861 = vunpack.c.l.b16 %v295
        %v862 = vunpack.c.l.b16 %v296
        %v863 = vunpack.c.l.b16 %v298
        %v864 = vunpack.c.l.b16 %v299
        %v865 = vunpack.c.l.b16 %v301
        %v866 = vunpack.c.l.b16 %v302
        %v867 = vunpack.c.l.b16 %v304
        %v868 = vunpack.c.l.b16 %v305
        %v869 = vunpack.c.l.b16 %v307
        %v870 = vunpack.c.l.b16 %v308
        %v871 = vunpack.c.l.b16 %v310
        %v872 = vunpack.c.l.b16 %v311
        %v873 = vunpack.c.l.b16 %v313
        %v874 = vunpack.c.l.b16 %v314
        %v875 = vunpack.c.l.b16 %v316
        %v876 = vunpack.c.l.b16 %v317
        %v877 = vunpack.c.l.b16 %v319
        %v878 = vunpack.c.l.b16 %v320
        %v879 = vunpack.c.l.b16 %v322
        %v880 = vunpack.c.l.b16 %v323
        %v881 = vunpack.c.l.b16 %v325
        %v882 = vunpack.c.l.b16 %v326
        %v883 = vunpack.c.l.b16 %v328
        %v884 = vunpack.c.l.b16 %v329
        %v885 = vunpack.c.l.b16 %v331
        %v886 = vunpack.c.l.b16 %v332
        %v887 = vunpack.c.l.b16 %v334
        %v888 = vunpack.c.l.b16 %v335
        %v889 = vunpack.c.l.b16 %v337
        %v890 = vunpack.c.l.b16 %v338
        %v891 = vunpack.c.l.b16 %v340
        %v892 = vunpack.c.l.b16 %v341
        %v893 = vpack.c.b16 %v862, %v861
        %v894 = vpack.c.b16 %v864, %v863
        %v895 = vpack.c.b16 %v866, %v865
        %v896 = vpack.c.b16 %v868, %v867
        %v897 = vpack.c.b16 %v870, %v869
        %v898 = vpack.c.b16 %v872, %v871
        %v899 = vpack.c.b16 %v874, %v873
        %v900 = vpack.c.b16 %v876, %v875
        %v901 = vpack.c.b16 %v878, %v877
        %v902 = vpack.c.b16 %v880, %v879
        %v903 = vpack.c.b16 %v882, %v881
        %v904 = vpack.c.b16 %v884, %v883
        %v905 = vpack.c.b16 %v886, %v885
        %v906 = vpack.c.b16 %v888, %v887
        %v907 = vpack.c.b16 %v890, %v889
        %v908 = vpack.c.b16 %v892, %v891
        %909 = vrot.lane.b32.xlu0 %v893, 12
        %v910 = vpop.permute.xlu0 %909
        %911 = vrot.lane.b32.xlu0 %v894, 12
        %v912 = vpop.permute.xlu0 %911
        %913 = vrot.lane.b32.xlu0 %v895, 12
        %v914 = vpop.permute.xlu0 %913
        %915 = vrot.lane.b32.xlu0 %v896, 12
        %v916 = vpop.permute.xlu0 %915
        %917 = vrot.lane.b32.xlu0 %v897, 12
        %v918 = vpop.permute.xlu0 %917
        %919 = vrot.lane.b32.xlu0 %v898, 12
        %v920 = vpop.permute.xlu0 %919
        %921 = vrot.lane.b32.xlu0 %v899, 12
        %v922 = vpop.permute.xlu0 %921
        %923 = vrot.lane.b32.xlu0 %v900, 12
        %v924 = vpop.permute.xlu0 %923
        %925 = vrot.lane.b32.xlu0 %v901, 12
        %v926 = vpop.permute.xlu0 %925
        %927 = vrot.lane.b32.xlu0 %v902, 12
        %v928 = vpop.permute.xlu0 %927
        %929 = vrot.lane.b32.xlu0 %v903, 12
        %v930 = vpop.permute.xlu0 %929
        %931 = vrot.lane.b32.xlu0 %v904, 12
        %v932 = vpop.permute.xlu0 %931
        %933 = vrot.lane.b32.xlu0 %v905, 12
        %v934 = vpop.permute.xlu0 %933
        %935 = vrot.lane.b32.xlu0 %v906, 12
        %v936 = vpop.permute.xlu0 %935
        %937 = vrot.lane.b32.xlu0 %v907, 12
        %v938 = vpop.permute.xlu0 %937
        %939 = vrot.lane.b32.xlu0 %v908, 12
        %v940 = vpop.permute.xlu0 %939
        %v957 = vunpack.c.l.b16 %v297
        %v958 = vunpack.c.l.b16 %v300
        %v959 = vunpack.c.l.b16 %v303
        %v960 = vunpack.c.l.b16 %v306
        %v961 = vunpack.c.l.b16 %v309
        %v962 = vunpack.c.l.b16 %v312
        %v963 = vunpack.c.l.b16 %v315
        %v964 = vunpack.c.l.b16 %v318
        %v965 = vunpack.c.l.b16 %v321
        %v966 = vunpack.c.l.b16 %v324
        %v967 = vunpack.c.l.b16 %v327
        %v968 = vunpack.c.l.b16 %v330
        %v969 = vunpack.c.l.b16 %v333
        %v970 = vunpack.c.l.b16 %v336
        %v971 = vunpack.c.l.b16 %v339
        %v972 = vunpack.c.l.b16 %v342
        %v973 = vpack.c.b16 %v957, %v957
        %v974 = vpack.c.b16 %v958, %v958
        %v975 = vpack.c.b16 %v959, %v959
        %v976 = vpack.c.b16 %v960, %v960
        %v977 = vpack.c.b16 %v961, %v961
        %v978 = vpack.c.b16 %v962, %v962
        %v979 = vpack.c.b16 %v963, %v963
        %v980 = vpack.c.b16 %v964, %v964
        %v981 = vpack.c.b16 %v965, %v965
        %v982 = vpack.c.b16 %v966, %v966
        %v983 = vpack.c.b16 %v967, %v967
        %v984 = vpack.c.b16 %v968, %v968
        %v985 = vpack.c.b16 %v969, %v969
        %v986 = vpack.c.b16 %v970, %v970
        %v987 = vpack.c.b16 %v971, %v971
        %v988 = vpack.c.b16 %v972, %v972
        %v990 = vshrl.u32 %v893, 16
        %v992 = vshll.u32 %v893, 16
        %v994 = vrot.slane %v992, 1
        %v995 = vor.u32 %v990, %v994
        %v997 = vshll.u32 %v973, 16
        %v999 = vrot.slane %v997, 1
        %v1000 = vsel %vm523, %v995, %v999
        %v1002 = vshrl.u32 %v894, 16
        %v1004 = vshll.u32 %v894, 16
        %v1006 = vrot.slane %v1004, 1
        %v1007 = vor.u32 %v1002, %v1006
        %v1009 = vshll.u32 %v974, 16
        %v1011 = vrot.slane %v1009, 1
        %v1012 = vsel %vm523, %v1007, %v1011
        %v1014 = vshrl.u32 %v895, 16
        %v1016 = vshll.u32 %v895, 16
        %v1018 = vrot.slane %v1016, 1
        %v1019 = vor.u32 %v1014, %v1018
        %v1021 = vshll.u32 %v975, 16
        %v1023 = vrot.slane %v1021, 1
        %v1024 = vsel %vm523, %v1019, %v1023
        %v1026 = vshrl.u32 %v896, 16
        %v1028 = vshll.u32 %v896, 16
        %v1030 = vrot.slane %v1028, 1
        %v1031 = vor.u32 %v1026, %v1030
        %v1033 = vshll.u32 %v976, 16
        %v1035 = vrot.slane %v1033, 1
        %v1036 = vsel %vm523, %v1031, %v1035
        %v1038 = vshrl.u32 %v897, 16
        %v1040 = vshll.u32 %v897, 16
        %v1042 = vrot.slane %v1040, 1
        %v1043 = vor.u32 %v1038, %v1042
        %v1045 = vshll.u32 %v977, 16
        %v1047 = vrot.slane %v1045, 1
        %v1048 = vsel %vm523, %v1043, %v1047
        %v1050 = vshrl.u32 %v898, 16
        %v1052 = vshll.u32 %v898, 16
        %v1054 = vrot.slane %v1052, 1
        %v1055 = vor.u32 %v1050, %v1054
        %v1057 = vshll.u32 %v978, 16
        %v1059 = vrot.slane %v1057, 1
        %v1060 = vsel %vm523, %v1055, %v1059
        %v1062 = vshrl.u32 %v899, 16
        %v1064 = vshll.u32 %v899, 16
        %v1066 = vrot.slane %v1064, 1
        %v1067 = vor.u32 %v1062, %v1066
        %v1069 = vshll.u32 %v979, 16
        %v1071 = vrot.slane %v1069, 1
        %v1072 = vsel %vm523, %v1067, %v1071
        %v1074 = vshrl.u32 %v900, 16
        %v1076 = vshll.u32 %v900, 16
        %v1078 = vrot.slane %v1076, 1
        %v1079 = vor.u32 %v1074, %v1078
        %v1081 = vshll.u32 %v980, 16
        %v1083 = vrot.slane %v1081, 1
        %v1084 = vsel %vm523, %v1079, %v1083
        %v1086 = vshrl.u32 %v901, 16
        %v1088 = vshll.u32 %v901, 16
        %v1090 = vrot.slane %v1088, 1
        %v1091 = vor.u32 %v1086, %v1090
        %v1093 = vshll.u32 %v981, 16
        %v1095 = vrot.slane %v1093, 1
        %v1096 = vsel %vm523, %v1091, %v1095
        %v1098 = vshrl.u32 %v902, 16
        %v1100 = vshll.u32 %v902, 16
        %v1102 = vrot.slane %v1100, 1
        %v1103 = vor.u32 %v1098, %v1102
        %v1105 = vshll.u32 %v982, 16
        %v1107 = vrot.slane %v1105, 1
        %v1108 = vsel %vm523, %v1103, %v1107
        %v1110 = vshrl.u32 %v903, 16
        %v1112 = vshll.u32 %v903, 16
        %v1114 = vrot.slane %v1112, 1
        %v1115 = vor.u32 %v1110, %v1114
        %v1117 = vshll.u32 %v983, 16
        %v1119 = vrot.slane %v1117, 1
        %v1120 = vsel %vm523, %v1115, %v1119
        %v1122 = vshrl.u32 %v904, 16
        %v1124 = vshll.u32 %v904, 16
        %v1126 = vrot.slane %v1124, 1
        %v1127 = vor.u32 %v1122, %v1126
        %v1129 = vshll.u32 %v984, 16
        %v1131 = vrot.slane %v1129, 1
        %v1132 = vsel %vm523, %v1127, %v1131
        %v1134 = vshrl.u32 %v905, 16
        %v1136 = vshll.u32 %v905, 16
        %v1138 = vrot.slane %v1136, 1
        %v1139 = vor.u32 %v1134, %v1138
        %v1141 = vshll.u32 %v985, 16
        %v1143 = vrot.slane %v1141, 1
        %v1144 = vsel %vm523, %v1139, %v1143
        %v1146 = vshrl.u32 %v906, 16
        %v1148 = vshll.u32 %v906, 16
        %v1150 = vrot.slane %v1148, 1
        %v1151 = vor.u32 %v1146, %v1150
        %v1153 = vshll.u32 %v986, 16
        %v1155 = vrot.slane %v1153, 1
        %v1156 = vsel %vm523, %v1151, %v1155
        %v1158 = vshrl.u32 %v907, 16
        %v1160 = vshll.u32 %v907, 16
        %v1162 = vrot.slane %v1160, 1
        %v1163 = vor.u32 %v1158, %v1162
        %v1165 = vshll.u32 %v987, 16
        %v1167 = vrot.slane %v1165, 1
        %v1168 = vsel %vm523, %v1163, %v1167
        %v1170 = vshrl.u32 %v908, 16
        %v1172 = vshll.u32 %v908, 16
        %v1174 = vrot.slane %v1172, 1
        %v1175 = vor.u32 %v1170, %v1174
        %v1177 = vshll.u32 %v988, 16
        %v1179 = vrot.slane %v1177, 1
        %v1180 = vsel %vm523, %v1175, %v1179
        %1181 = vrot.lane.b32.xlu0 %v1000, 16
        %v1182 = vpop.permute.xlu0 %1181
        %1183 = vrot.lane.b32.xlu0 %v1012, 16
        %v1184 = vpop.permute.xlu0 %1183
        %1185 = vrot.lane.b32.xlu0 %v1024, 16
        %v1186 = vpop.permute.xlu0 %1185
        %1187 = vrot.lane.b32.xlu0 %v1036, 16
        %v1188 = vpop.permute.xlu0 %1187
        %1189 = vrot.lane.b32.xlu0 %v1048, 16
        %v1190 = vpop.permute.xlu0 %1189
        %1191 = vrot.lane.b32.xlu0 %v1060, 16
        %v1192 = vpop.permute.xlu0 %1191
        %1193 = vrot.lane.b32.xlu0 %v1072, 16
        %v1194 = vpop.permute.xlu0 %1193
        %1195 = vrot.lane.b32.xlu0 %v1084, 16
        %v1196 = vpop.permute.xlu0 %1195
        %1197 = vrot.lane.b32.xlu0 %v1096, 16
        %v1198 = vpop.permute.xlu0 %1197
        %1199 = vrot.lane.b32.xlu0 %v1108, 16
        %v1200 = vpop.permute.xlu0 %1199
        %1201 = vrot.lane.b32.xlu0 %v1120, 16
        %v1202 = vpop.permute.xlu0 %1201
        %1203 = vrot.lane.b32.xlu0 %v1132, 16
        %v1204 = vpop.permute.xlu0 %1203
        %1205 = vrot.lane.b32.xlu0 %v1144, 16
        %v1206 = vpop.permute.xlu0 %1205
        %1207 = vrot.lane.b32.xlu0 %v1156, 16
        %v1208 = vpop.permute.xlu0 %1207
        %1209 = vrot.lane.b32.xlu0 %v1168, 16
        %v1210 = vpop.permute.xlu0 %1209
        %1211 = vrot.lane.b32.xlu0 %v1180, 16
        %v1212 = vpop.permute.xlu0 %1211
        %v1213 = vrot.slane %v893, 1
        %v1214 = vrot.slane %v973, 1
        %v1215 = vsel %vm748, %v1213, %v1214
        %v1216 = vrot.slane %v894, 1
        %v1217 = vrot.slane %v974, 1
        %v1218 = vsel %vm748, %v1216, %v1217
        %v1219 = vrot.slane %v895, 1
        %v1220 = vrot.slane %v975, 1
        %v1221 = vsel %vm748, %v1219, %v1220
        %v1222 = vrot.slane %v896, 1
        %v1223 = vrot.slane %v976, 1
        %v1224 = vsel %vm748, %v1222, %v1223
        %v1225 = vrot.slane %v897, 1
        %v1226 = vrot.slane %v977, 1
        %v1227 = vsel %vm748, %v1225, %v1226
        %v1228 = vrot.slane %v898, 1
        %v1229 = vrot.slane %v978, 1
        %v1230 = vsel %vm748, %v1228, %v1229
        %v1231 = vrot.slane %v899, 1
        %v1232 = vrot.slane %v979, 1
        %v1233 = vsel %vm748, %v1231, %v1232
        %v1234 = vrot.slane %v900, 1
        %v1235 = vrot.slane %v980, 1
        %v1236 = vsel %vm748, %v1234, %v1235
        %v1237 = vrot.slane %v901, 1
        %v1238 = vrot.slane %v981, 1
        %v1239 = vsel %vm748, %v1237, %v1238
        %v1240 = vrot.slane %v902, 1
        %v1241 = vrot.slane %v982, 1
        %v1242 = vsel %vm748, %v1240, %v1241
        %v1243 = vrot.slane %v903, 1
        %v1244 = vrot.slane %v983, 1
        %v1245 = vsel %vm748, %v1243, %v1244
        %v1246 = vrot.slane %v904, 1
        %v1247 = vrot.slane %v984, 1
        %v1248 = vsel %vm748, %v1246, %v1247
        %v1249 = vrot.slane %v905, 1
        %v1250 = vrot.slane %v985, 1
        %v1251 = vsel %vm748, %v1249, %v1250
        %v1252 = vrot.slane %v906, 1
        %v1253 = vrot.slane %v986, 1
        %v1254 = vsel %vm748, %v1252, %v1253
        %v1255 = vrot.slane %v907, 1
        %v1256 = vrot.slane %v987, 1
        %v1257 = vsel %vm748, %v1255, %v1256
        %v1258 = vrot.slane %v908, 1
        %v1259 = vrot.slane %v988, 1
        %v1260 = vsel %vm748, %v1258, %v1259
        %1261 = vrot.lane.b32.xlu0 %v1215, 20
        %v1262 = vpop.permute.xlu0 %1261
        %1263 = vrot.lane.b32.xlu0 %v1218, 20
        %v1264 = vpop.permute.xlu0 %1263
        %1265 = vrot.lane.b32.xlu0 %v1221, 20
        %v1266 = vpop.permute.xlu0 %1265
        %1267 = vrot.lane.b32.xlu0 %v1224, 20
        %v1268 = vpop.permute.xlu0 %1267
        %1269 = vrot.lane.b32.xlu0 %v1227, 20
        %v1270 = vpop.permute.xlu0 %1269
        %1271 = vrot.lane.b32.xlu0 %v1230, 20
        %v1272 = vpop.permute.xlu0 %1271
        %1273 = vrot.lane.b32.xlu0 %v1233, 20
        %v1274 = vpop.permute.xlu0 %1273
        %1275 = vrot.lane.b32.xlu0 %v1236, 20
        %v1276 = vpop.permute.xlu0 %1275
        %1277 = vrot.lane.b32.xlu0 %v1239, 20
        %v1278 = vpop.permute.xlu0 %1277
        %1279 = vrot.lane.b32.xlu0 %v1242, 20
        %v1280 = vpop.permute.xlu0 %1279
        %1281 = vrot.lane.b32.xlu0 %v1245, 20
        %v1282 = vpop.permute.xlu0 %1281
        %1283 = vrot.lane.b32.xlu0 %v1248, 20
        %v1284 = vpop.permute.xlu0 %1283
        %1285 = vrot.lane.b32.xlu0 %v1251, 20
        %v1286 = vpop.permute.xlu0 %1285
        %1287 = vrot.lane.b32.xlu0 %v1254, 20
        %v1288 = vpop.permute.xlu0 %1287
        %1289 = vrot.lane.b32.xlu0 %v1257, 20
        %v1290 = vpop.permute.xlu0 %1289
        %1291 = vrot.lane.b32.xlu0 %v1260, 20
        %v1292 = vpop.permute.xlu0 %1291
        %v1325 = vunpack.c.l.b16 %v347
        %v1326 = vunpack.c.l.b16 %v348
        %v1327 = vunpack.c.l.b16 %v350
        %v1328 = vunpack.c.l.b16 %v351
        %v1329 = vunpack.c.l.b16 %v353
        %v1330 = vunpack.c.l.b16 %v354
        %v1331 = vunpack.c.l.b16 %v356
        %v1332 = vunpack.c.l.b16 %v357
        %v1333 = vunpack.c.l.b16 %v359
        %v1334 = vunpack.c.l.b16 %v360
        %v1335 = vunpack.c.l.b16 %v362
        %v1336 = vunpack.c.l.b16 %v363
        %v1337 = vunpack.c.l.b16 %v365
        %v1338 = vunpack.c.l.b16 %v366
        %v1339 = vunpack.c.l.b16 %v368
        %v1340 = vunpack.c.l.b16 %v369
        %v1341 = vunpack.c.l.b16 %v371
        %v1342 = vunpack.c.l.b16 %v372
        %v1343 = vunpack.c.l.b16 %v374
        %v1344 = vunpack.c.l.b16 %v375
        %v1345 = vunpack.c.l.b16 %v377
        %v1346 = vunpack.c.l.b16 %v378
        %v1347 = vunpack.c.l.b16 %v380
        %v1348 = vunpack.c.l.b16 %v381
        %v1349 = vunpack.c.l.b16 %v383
        %v1350 = vunpack.c.l.b16 %v384
        %v1351 = vunpack.c.l.b16 %v386
        %v1352 = vunpack.c.l.b16 %v387
        %v1353 = vunpack.c.l.b16 %v389
        %v1354 = vunpack.c.l.b16 %v390
        %v1355 = vunpack.c.l.b16 %v392
        %v1356 = vunpack.c.l.b16 %v393
        %v1357 = vpack.c.b16 %v1326, %v1325
        %v1358 = vpack.c.b16 %v1328, %v1327
        %v1359 = vpack.c.b16 %v1330, %v1329
        %v1360 = vpack.c.b16 %v1332, %v1331
        %v1361 = vpack.c.b16 %v1334, %v1333
        %v1362 = vpack.c.b16 %v1336, %v1335
        %v1363 = vpack.c.b16 %v1338, %v1337
        %v1364 = vpack.c.b16 %v1340, %v1339
        %v1365 = vpack.c.b16 %v1342, %v1341
        %v1366 = vpack.c.b16 %v1344, %v1343
        %v1367 = vpack.c.b16 %v1346, %v1345
        %v1368 = vpack.c.b16 %v1348, %v1347
        %v1369 = vpack.c.b16 %v1350, %v1349
        %v1370 = vpack.c.b16 %v1352, %v1351
        %v1371 = vpack.c.b16 %v1354, %v1353
        %v1372 = vpack.c.b16 %v1356, %v1355
        %1373 = vrot.lane.b32.xlu0 %v1357, 24
        %v1374 = vpop.permute.xlu0 %1373
        %1375 = vrot.lane.b32.xlu0 %v1358, 24
        %v1376 = vpop.permute.xlu0 %1375
        %1377 = vrot.lane.b32.xlu0 %v1359, 24
        %v1378 = vpop.permute.xlu0 %1377
        %1379 = vrot.lane.b32.xlu0 %v1360, 24
        %v1380 = vpop.permute.xlu0 %1379
        %1381 = vrot.lane.b32.xlu0 %v1361, 24
        %v1382 = vpop.permute.xlu0 %1381
        %1383 = vrot.lane.b32.xlu0 %v1362, 24
        %v1384 = vpop.permute.xlu0 %1383
        %1385 = vrot.lane.b32.xlu0 %v1363, 24
        %v1386 = vpop.permute.xlu0 %1385
        %1387 = vrot.lane.b32.xlu0 %v1364, 24
        %v1388 = vpop.permute.xlu0 %1387
        %1389 = vrot.lane.b32.xlu0 %v1365, 24
        %v1390 = vpop.permute.xlu0 %1389
        %1391 = vrot.lane.b32.xlu0 %v1366, 24
        %v1392 = vpop.permute.xlu0 %1391
        %1393 = vrot.lane.b32.xlu0 %v1367, 24
        %v1394 = vpop.permute.xlu0 %1393
        %1395 = vrot.lane.b32.xlu0 %v1368, 24
        %v1396 = vpop.permute.xlu0 %1395
        %1397 = vrot.lane.b32.xlu0 %v1369, 24
        %v1398 = vpop.permute.xlu0 %1397
        %1399 = vrot.lane.b32.xlu0 %v1370, 24
        %v1400 = vpop.permute.xlu0 %1399
        %1401 = vrot.lane.b32.xlu0 %v1371, 24
        %v1402 = vpop.permute.xlu0 %1401
        %1403 = vrot.lane.b32.xlu0 %v1372, 24
        %v1404 = vpop.permute.xlu0 %1403
        %v1421 = vunpack.c.l.b16 %v349
        %v1422 = vunpack.c.l.b16 %v352
        %v1423 = vunpack.c.l.b16 %v355
        %v1424 = vunpack.c.l.b16 %v358
        %v1425 = vunpack.c.l.b16 %v361
        %v1426 = vunpack.c.l.b16 %v364
        %v1427 = vunpack.c.l.b16 %v367
        %v1428 = vunpack.c.l.b16 %v370
        %v1429 = vunpack.c.l.b16 %v373
        %v1430 = vunpack.c.l.b16 %v376
        %v1431 = vunpack.c.l.b16 %v379
        %v1432 = vunpack.c.l.b16 %v382
        %v1433 = vunpack.c.l.b16 %v385
        %v1434 = vunpack.c.l.b16 %v388
        %v1435 = vunpack.c.l.b16 %v391
        %v1436 = vunpack.c.l.b16 %v394
        %v1437 = vpack.c.b16 %v1421, %v1421
        %v1438 = vpack.c.b16 %v1422, %v1422
        %v1439 = vpack.c.b16 %v1423, %v1423
        %v1440 = vpack.c.b16 %v1424, %v1424
        %v1441 = vpack.c.b16 %v1425, %v1425
        %v1442 = vpack.c.b16 %v1426, %v1426
        %v1443 = vpack.c.b16 %v1427, %v1427
        %v1444 = vpack.c.b16 %v1428, %v1428
        %v1445 = vpack.c.b16 %v1429, %v1429
        %v1446 = vpack.c.b16 %v1430, %v1430
        %v1447 = vpack.c.b16 %v1431, %v1431
        %v1448 = vpack.c.b16 %v1432, %v1432
        %v1449 = vpack.c.b16 %v1433, %v1433
        %v1450 = vpack.c.b16 %v1434, %v1434
        %v1451 = vpack.c.b16 %v1435, %v1435
        %v1452 = vpack.c.b16 %v1436, %v1436
        %v1454 = vshrl.u32 %v1357, 16
        %v1456 = vshll.u32 %v1357, 16
        %v1458 = vrot.slane %v1456, 1
        %v1459 = vor.u32 %v1454, %v1458
        %v1461 = vshll.u32 %v1437, 16
        %v1463 = vrot.slane %v1461, 1
        %v1464 = vsel %vm523, %v1459, %v1463
        %v1466 = vshrl.u32 %v1358, 16
        %v1468 = vshll.u32 %v1358, 16
        %v1470 = vrot.slane %v1468, 1
        %v1471 = vor.u32 %v1466, %v1470
        %v1473 = vshll.u32 %v1438, 16
        %v1475 = vrot.slane %v1473, 1
        %v1476 = vsel %vm523, %v1471, %v1475
        %v1478 = vshrl.u32 %v1359, 16
        %v1480 = vshll.u32 %v1359, 16
        %v1482 = vrot.slane %v1480, 1
        %v1483 = vor.u32 %v1478, %v1482
        %v1485 = vshll.u32 %v1439, 16
        %v1487 = vrot.slane %v1485, 1
        %v1488 = vsel %vm523, %v1483, %v1487
        %v1490 = vshrl.u32 %v1360, 16
        %v1492 = vshll.u32 %v1360, 16
        %v1494 = vrot.slane %v1492, 1
        %v1495 = vor.u32 %v1490, %v1494
        %v1497 = vshll.u32 %v1440, 16
        %v1499 = vrot.slane %v1497, 1
        %v1500 = vsel %vm523, %v1495, %v1499
        %v1502 = vshrl.u32 %v1361, 16
        %v1504 = vshll.u32 %v1361, 16
        %v1506 = vrot.slane %v1504, 1
        %v1507 = vor.u32 %v1502, %v1506
        %v1509 = vshll.u32 %v1441, 16
        %v1511 = vrot.slane %v1509, 1
        %v1512 = vsel %vm523, %v1507, %v1511
        %v1514 = vshrl.u32 %v1362, 16
        %v1516 = vshll.u32 %v1362, 16
        %v1518 = vrot.slane %v1516, 1
        %v1519 = vor.u32 %v1514, %v1518
        %v1521 = vshll.u32 %v1442, 16
        %v1523 = vrot.slane %v1521, 1
        %v1524 = vsel %vm523, %v1519, %v1523
        %v1526 = vshrl.u32 %v1363, 16
        %v1528 = vshll.u32 %v1363, 16
        %v1530 = vrot.slane %v1528, 1
        %v1531 = vor.u32 %v1526, %v1530
        %v1533 = vshll.u32 %v1443, 16
        %v1535 = vrot.slane %v1533, 1
        %v1536 = vsel %vm523, %v1531, %v1535
        %v1538 = vshrl.u32 %v1364, 16
        %v1540 = vshll.u32 %v1364, 16
        %v1542 = vrot.slane %v1540, 1
        %v1543 = vor.u32 %v1538, %v1542
        %v1545 = vshll.u32 %v1444, 16
        %v1547 = vrot.slane %v1545, 1
        %v1548 = vsel %vm523, %v1543, %v1547
        %v1550 = vshrl.u32 %v1365, 16
        %v1552 = vshll.u32 %v1365, 16
        %v1554 = vrot.slane %v1552, 1
        %v1555 = vor.u32 %v1550, %v1554
        %v1557 = vshll.u32 %v1445, 16
        %v1559 = vrot.slane %v1557, 1
        %v1560 = vsel %vm523, %v1555, %v1559
        %v1562 = vshrl.u32 %v1366, 16
        %v1564 = vshll.u32 %v1366, 16
        %v1566 = vrot.slane %v1564, 1
        %v1567 = vor.u32 %v1562, %v1566
        %v1569 = vshll.u32 %v1446, 16
        %v1571 = vrot.slane %v1569, 1
        %v1572 = vsel %vm523, %v1567, %v1571
        %v1574 = vshrl.u32 %v1367, 16
        %v1576 = vshll.u32 %v1367, 16
        %v1578 = vrot.slane %v1576, 1
        %v1579 = vor.u32 %v1574, %v1578
        %v1581 = vshll.u32 %v1447, 16
        %v1583 = vrot.slane %v1581, 1
        %v1584 = vsel %vm523, %v1579, %v1583
        %v1586 = vshrl.u32 %v1368, 16
        %v1588 = vshll.u32 %v1368, 16
        %v1590 = vrot.slane %v1588, 1
        %v1591 = vor.u32 %v1586, %v1590
        %v1593 = vshll.u32 %v1448, 16
        %v1595 = vrot.slane %v1593, 1
        %v1596 = vsel %vm523, %v1591, %v1595
        %v1598 = vshrl.u32 %v1369, 16
        %v1600 = vshll.u32 %v1369, 16
        %v1602 = vrot.slane %v1600, 1
        %v1603 = vor.u32 %v1598, %v1602
        %v1605 = vshll.u32 %v1449, 16
        %v1607 = vrot.slane %v1605, 1
        %v1608 = vsel %vm523, %v1603, %v1607
        %v1610 = vshrl.u32 %v1370, 16
        %v1612 = vshll.u32 %v1370, 16
        %v1614 = vrot.slane %v1612, 1
        %v1615 = vor.u32 %v1610, %v1614
        %v1617 = vshll.u32 %v1450, 16
        %v1619 = vrot.slane %v1617, 1
        %v1620 = vsel %vm523, %v1615, %v1619
        %v1622 = vshrl.u32 %v1371, 16
        %v1624 = vshll.u32 %v1371, 16
        %v1626 = vrot.slane %v1624, 1
        %v1627 = vor.u32 %v1622, %v1626
        %v1629 = vshll.u32 %v1451, 16
        %v1631 = vrot.slane %v1629, 1
        %v1632 = vsel %vm523, %v1627, %v1631
        %v1634 = vshrl.u32 %v1372, 16
        %v1636 = vshll.u32 %v1372, 16
        %v1638 = vrot.slane %v1636, 1
        %v1639 = vor.u32 %v1634, %v1638
        %v1641 = vshll.u32 %v1452, 16
        %v1643 = vrot.slane %v1641, 1
        %v1644 = vsel %vm523, %v1639, %v1643
        %1645 = vrot.lane.b32.xlu0 %v1464, 28
        %v1646 = vpop.permute.xlu0 %1645
        %1647 = vrot.lane.b32.xlu0 %v1476, 28
        %v1648 = vpop.permute.xlu0 %1647
        %1649 = vrot.lane.b32.xlu0 %v1488, 28
        %v1650 = vpop.permute.xlu0 %1649
        %1651 = vrot.lane.b32.xlu0 %v1500, 28
        %v1652 = vpop.permute.xlu0 %1651
        %1653 = vrot.lane.b32.xlu0 %v1512, 28
        %v1654 = vpop.permute.xlu0 %1653
        %1655 = vrot.lane.b32.xlu0 %v1524, 28
        %v1656 = vpop.permute.xlu0 %1655
        %1657 = vrot.lane.b32.xlu0 %v1536, 28
        %v1658 = vpop.permute.xlu0 %1657
        %1659 = vrot.lane.b32.xlu0 %v1548, 28
        %v1660 = vpop.permute.xlu0 %1659
        %1661 = vrot.lane.b32.xlu0 %v1560, 28
        %v1662 = vpop.permute.xlu0 %1661
        %1663 = vrot.lane.b32.xlu0 %v1572, 28
        %v1664 = vpop.permute.xlu0 %1663
        %1665 = vrot.lane.b32.xlu0 %v1584, 28
        %v1666 = vpop.permute.xlu0 %1665
        %1667 = vrot.lane.b32.xlu0 %v1596, 28
        %v1668 = vpop.permute.xlu0 %1667
        %1669 = vrot.lane.b32.xlu0 %v1608, 28
        %v1670 = vpop.permute.xlu0 %1669
        %1671 = vrot.lane.b32.xlu0 %v1620, 28
        %v1672 = vpop.permute.xlu0 %1671
        %1673 = vrot.lane.b32.xlu0 %v1632, 28
        %v1674 = vpop.permute.xlu0 %1673
        %1675 = vrot.lane.b32.xlu0 %v1644, 28
        %v1676 = vpop.permute.xlu0 %1675
        %v1677 = vrot.slane %v1357, 1
        %v1678 = vrot.slane %v1437, 1
        %v1679 = vsel %vm748, %v1677, %v1678
        %v1680 = vrot.slane %v1358, 1
        %v1681 = vrot.slane %v1438, 1
        %v1682 = vsel %vm748, %v1680, %v1681
        %v1683 = vrot.slane %v1359, 1
        %v1684 = vrot.slane %v1439, 1
        %v1685 = vsel %vm748, %v1683, %v1684
        %v1686 = vrot.slane %v1360, 1
        %v1687 = vrot.slane %v1440, 1
        %v1688 = vsel %vm748, %v1686, %v1687
        %v1689 = vrot.slane %v1361, 1
        %v1690 = vrot.slane %v1441, 1
        %v1691 = vsel %vm748, %v1689, %v1690
        %v1692 = vrot.slane %v1362, 1
        %v1693 = vrot.slane %v1442, 1
        %v1694 = vsel %vm748, %v1692, %v1693
        %v1695 = vrot.slane %v1363, 1
        %v1696 = vrot.slane %v1443, 1
        %v1697 = vsel %vm748, %v1695, %v1696
        %v1698 = vrot.slane %v1364, 1
        %v1699 = vrot.slane %v1444, 1
        %v1700 = vsel %vm748, %v1698, %v1699
        %v1701 = vrot.slane %v1365, 1
        %v1702 = vrot.slane %v1445, 1
        %v1703 = vsel %vm748, %v1701, %v1702
        %v1704 = vrot.slane %v1366, 1
        %v1705 = vrot.slane %v1446, 1
        %v1706 = vsel %vm748, %v1704, %v1705
        %v1707 = vrot.slane %v1367, 1
        %v1708 = vrot.slane %v1447, 1
        %v1709 = vsel %vm748, %v1707, %v1708
        %v1710 = vrot.slane %v1368, 1
        %v1711 = vrot.slane %v1448, 1
        %v1712 = vsel %vm748, %v1710, %v1711
        %v1713 = vrot.slane %v1369, 1
        %v1714 = vrot.slane %v1449, 1
        %v1715 = vsel %vm748, %v1713, %v1714
        %v1716 = vrot.slane %v1370, 1
        %v1717 = vrot.slane %v1450, 1
        %v1718 = vsel %vm748, %v1716, %v1717
        %v1719 = vrot.slane %v1371, 1
        %v1720 = vrot.slane %v1451, 1
        %v1721 = vsel %vm748, %v1719, %v1720
        %v1722 = vrot.slane %v1372, 1
        %v1723 = vrot.slane %v1452, 1
        %v1724 = vsel %vm748, %v1722, %v1723
        %1725 = vrot.lane.b32.xlu0 %v1679, 32
        %v1726 = vpop.permute.xlu0 %1725
        %1727 = vrot.lane.b32.xlu0 %v1682, 32
        %v1728 = vpop.permute.xlu0 %1727
        %1729 = vrot.lane.b32.xlu0 %v1685, 32
        %v1730 = vpop.permute.xlu0 %1729
        %1731 = vrot.lane.b32.xlu0 %v1688, 32
        %v1732 = vpop.permute.xlu0 %1731
        %1733 = vrot.lane.b32.xlu0 %v1691, 32
        %v1734 = vpop.permute.xlu0 %1733
        %1735 = vrot.lane.b32.xlu0 %v1694, 32
        %v1736 = vpop.permute.xlu0 %1735
        %1737 = vrot.lane.b32.xlu0 %v1697, 32
        %v1738 = vpop.permute.xlu0 %1737
        %1739 = vrot.lane.b32.xlu0 %v1700, 32
        %v1740 = vpop.permute.xlu0 %1739
        %1741 = vrot.lane.b32.xlu0 %v1703, 32
        %v1742 = vpop.permute.xlu0 %1741
        %1743 = vrot.lane.b32.xlu0 %v1706, 32
        %v1744 = vpop.permute.xlu0 %1743
        %1745 = vrot.lane.b32.xlu0 %v1709, 32
        %v1746 = vpop.permute.xlu0 %1745
        %1747 = vrot.lane.b32.xlu0 %v1712, 32
        %v1748 = vpop.permute.xlu0 %1747
        %1749 = vrot.lane.b32.xlu0 %v1715, 32
        %v1750 = vpop.permute.xlu0 %1749
        %1751 = vrot.lane.b32.xlu0 %v1718, 32
        %v1752 = vpop.permute.xlu0 %1751
        %1753 = vrot.lane.b32.xlu0 %v1721, 32
        %v1754 = vpop.permute.xlu0 %1753
        %1755 = vrot.lane.b32.xlu0 %v1724, 32
        %v1756 = vpop.permute.xlu0 %1755
        %vm1757 = vcmask 31744
        %v1759 = vsel %vm1757, %v459, %v717
        %v1761 = vsel %vm1757, %v460, %v719
        %v1763 = vsel %vm1757, %v461, %v721
        %v1765 = vsel %vm1757, %v462, %v723
        %v1767 = vsel %vm1757, %v463, %v725
        %v1769 = vsel %vm1757, %v464, %v727
        %v1771 = vsel %vm1757, %v465, %v729
        %v1773 = vsel %vm1757, %v466, %v731
        %v1775 = vsel %vm1757, %v467, %v733
        %v1777 = vsel %vm1757, %v468, %v735
        %v1779 = vsel %vm1757, %v469, %v737
        %v1781 = vsel %vm1757, %v470, %v739
        %v1783 = vsel %vm1757, %v471, %v741
        %v1785 = vsel %vm1757, %v472, %v743
        %v1787 = vsel %vm1757, %v473, %v745
        %v1789 = vsel %vm1757, %v474, %v747
        %vm1790 = vcmask 64512
        %v1792 = vsel %vm1790, %v1759, %v798
        %v1794 = vsel %vm1790, %v1761, %v800
        %v1796 = vsel %vm1790, %v1763, %v802
        %v1798 = vsel %vm1790, %v1765, %v804
        %v1800 = vsel %vm1790, %v1767, %v806
        %v1802 = vsel %vm1790, %v1769, %v808
        %v1804 = vsel %vm1790, %v1771, %v810
        %v1806 = vsel %vm1790, %v1773, %v812
        %v1808 = vsel %vm1790, %v1775, %v814
        %v1810 = vsel %vm1790, %v1777, %v816
        %v1812 = vsel %vm1790, %v1779, %v818
        %v1814 = vsel %vm1790, %v1781, %v820
        %v1816 = vsel %vm1790, %v1783, %v822
        %v1818 = vsel %vm1790, %v1785, %v824
        %v1820 = vsel %vm1790, %v1787, %v826
        %v1822 = vsel %vm1790, %v1789, %v828
        %vm1823 = vcmask 97280
        %v1825 = vsel %vm1823, %v1792, %v910
        %v1827 = vsel %vm1823, %v1794, %v912
        %v1829 = vsel %vm1823, %v1796, %v914
        %v1831 = vsel %vm1823, %v1798, %v916
        %v1833 = vsel %vm1823, %v1800, %v918
        %v1835 = vsel %vm1823, %v1802, %v920
        %v1837 = vsel %vm1823, %v1804, %v922
        %v1839 = vsel %vm1823, %v1806, %v924
        %v1841 = vsel %vm1823, %v1808, %v926
        %v1843 = vsel %vm1823, %v1810, %v928
        %v1845 = vsel %vm1823, %v1812, %v930
        %v1847 = vsel %vm1823, %v1814, %v932
        %v1849 = vsel %vm1823, %v1816, %v934
        %v1851 = vsel %vm1823, %v1818, %v936
        %v1853 = vsel %vm1823, %v1820, %v938
        %v1855 = vsel %vm1823, %v1822, %v940
        %vm1856 = vcmask 130048
        %v1858 = vsel %vm1856, %v1825, %v1182
        %v1860 = vsel %vm1856, %v1827, %v1184
        %v1862 = vsel %vm1856, %v1829, %v1186
        %v1864 = vsel %vm1856, %v1831, %v1188
        %v1866 = vsel %vm1856, %v1833, %v1190
        %v1868 = vsel %vm1856, %v1835, %v1192
        %v1870 = vsel %vm1856, %v1837, %v1194
        %v1872 = vsel %vm1856, %v1839, %v1196
        %v1874 = vsel %vm1856, %v1841, %v1198
        %v1876 = vsel %vm1856, %v1843, %v1200
        %v1878 = vsel %vm1856, %v1845, %v1202
        %v1880 = vsel %vm1856, %v1847, %v1204
        %v1882 = vsel %vm1856, %v1849, %v1206
        %v1884 = vsel %vm1856, %v1851, %v1208
        %v1886 = vsel %vm1856, %v1853, %v1210
        %v1888 = vsel %vm1856, %v1855, %v1212
        %vm1889 = vcmask 162816
        %v1891 = vsel %vm1889, %v1858, %v1262
        %v1893 = vsel %vm1889, %v1860, %v1264
        %v1895 = vsel %vm1889, %v1862, %v1266
        %v1897 = vsel %vm1889, %v1864, %v1268
        %v1899 = vsel %vm1889, %v1866, %v1270
        %v1901 = vsel %vm1889, %v1868, %v1272
        %v1903 = vsel %vm1889, %v1870, %v1274
        %v1905 = vsel %vm1889, %v1872, %v1276
        %v1907 = vsel %vm1889, %v1874, %v1278
        %v1909 = vsel %vm1889, %v1876, %v1280
        %v1911 = vsel %vm1889, %v1878, %v1282
        %v1913 = vsel %vm1889, %v1880, %v1284
        %v1915 = vsel %vm1889, %v1882, %v1286
        %v1917 = vsel %vm1889, %v1884, %v1288
        %v1919 = vsel %vm1889, %v1886, %v1290
        %v1921 = vsel %vm1889, %v1888, %v1292
        %vm1922 = vcmask 195584
        %v1924 = vsel %vm1922, %v1891, %v1374
        %v1926 = vsel %vm1922, %v1893, %v1376
        %v1928 = vsel %vm1922, %v1895, %v1378
        %v1930 = vsel %vm1922, %v1897, %v1380
        %v1932 = vsel %vm1922, %v1899, %v1382
        %v1934 = vsel %vm1922, %v1901, %v1384
        %v1936 = vsel %vm1922, %v1903, %v1386
        %v1938 = vsel %vm1922, %v1905, %v1388
        %v1940 = vsel %vm1922, %v1907, %v1390
        %v1942 = vsel %vm1922, %v1909, %v1392
        %v1944 = vsel %vm1922, %v1911, %v1394
        %v1946 = vsel %vm1922, %v1913, %v1396
        %v1948 = vsel %vm1922, %v1915, %v1398
        %v1950 = vsel %vm1922, %v1917, %v1400
        %v1952 = vsel %vm1922, %v1919, %v1402
        %v1954 = vsel %vm1922, %v1921, %v1404
        %vm1955 = vcmask 228352
        %v1957 = vsel %vm1955, %v1924, %v1646
        %v1959 = vsel %vm1955, %v1926, %v1648
        %v1961 = vsel %vm1955, %v1928, %v1650
        %v1963 = vsel %vm1955, %v1930, %v1652
        %v1965 = vsel %vm1955, %v1932, %v1654
        %v1967 = vsel %vm1955, %v1934, %v1656
        %v1969 = vsel %vm1955, %v1936, %v1658
        %v1971 = vsel %vm1955, %v1938, %v1660
        %v1973 = vsel %vm1955, %v1940, %v1662
        %v1975 = vsel %vm1955, %v1942, %v1664
        %v1977 = vsel %vm1955, %v1944, %v1666
        %v1979 = vsel %vm1955, %v1946, %v1668
        %v1981 = vsel %vm1955, %v1948, %v1670
        %v1983 = vsel %vm1955, %v1950, %v1672
        %v1985 = vsel %vm1955, %v1952, %v1674
        %v1987 = vsel %vm1955, %v1954, %v1676
        %vm1988 = vcmask 261120
        %v1990 = vsel %vm1988, %v1957, %v1726
        %v1992 = vsel %vm1988, %v1959, %v1728
        %v1994 = vsel %vm1988, %v1961, %v1730
        %v1996 = vsel %vm1988, %v1963, %v1732
        %v1998 = vsel %vm1988, %v1965, %v1734
        %v2000 = vsel %vm1988, %v1967, %v1736
        %v2002 = vsel %vm1988, %v1969, %v1738
        %v2004 = vsel %vm1988, %v1971, %v1740
        %v2006 = vsel %vm1988, %v1973, %v1742
        %v2008 = vsel %vm1988, %v1975, %v1744
        %v2010 = vsel %vm1988, %v1977, %v1746
        %v2012 = vsel %vm1988, %v1979, %v1748
        %v2014 = vsel %vm1988, %v1981, %v1750
        %v2016 = vsel %vm1988, %v1983, %v1752
        %v2018 = vsel %vm1988, %v1985, %v1754
        %v2020 = vsel %vm1988, %v1987, %v1756
        %v2021 = vld [vmem:[%s1] sm:$0xf]
        %v2022 = vld [vmem:[%s1 + $0x4] sm:$0xf]
        %v2023 = vld [vmem:[%s1 + $0x8] sm:$0xf]
        %v2024 = vld [vmem:[%s1 + $0xc] sm:$0xf]
        %v2025 = vld [vmem:[%s1 + $0x10] sm:$0x3]
        %v2026 = vld [vmem:[%s2] sm:$0x1]
        %v2028 = vperm.slane %v2026, 0
        %v2035 = vunpack.c.l.b16 %v2021
        %v2036 = vunpack.c.l.b16 %v2022
        %v2037 = vunpack.c.l.b16 %v2023
        %v2038 = vunpack.c.l.b16 %v2024
        %v2039 = vunpack.c.l.b16 %v2025
        %v2040 = vpack.c.b16 %v2036, %v2035
        %v2041 = vpack.c.b16 %v2038, %v2037
        %v2042 = vpack.c.b16 %v2039, %v2039
        %vm2045 = vcmask 293888
        %v2046 = vsel %vm2045, %v1990, 0
        %v2048 = vsel %vm2045, %v1992, 0
        %v2050 = vsel %vm2045, %v1994, 0
        %v2052 = vsel %vm2045, %v1996, 0
        %v2054 = vsel %vm2045, %v1998, 0
        %v2056 = vsel %vm2045, %v2000, 0
        %v2058 = vsel %vm2045, %v2002, 0
        %v2060 = vsel %vm2045, %v2004, 0
        %v2062 = vsel %vm2045, %v2006, 0
        %v2064 = vsel %vm2045, %v2008, 0
        %v2066 = vsel %vm2045, %v2010, 0
        %v2068 = vsel %vm2045, %v2012, 0
        %v2070 = vsel %vm2045, %v2014, 0
        %v2072 = vsel %vm2045, %v2016, 0
        %v2074 = vsel %vm2045, %v2018, 0
        %v2076 = vsel %vm2045, %v2020, 0
        %vm2078 = vcmask 1041408
        %v2080 = vsel %vm2078, %v2042, 0
        %2082 = vmatpush.bf16.msra.mxu0 0
        %2083 = vmatpush.bf16.msra.mxu0 0
        %2084 = vmatpush.bf16.msra.mxu0 0
        %2085 = vmatpush.bf16.msra.mxu0 0
        %2086 = vmatpush.bf16.msra.mxu0 0
        %2087 = vmatpush.bf16.msra.mxu0 %v2080
        %2088 = vmatpush.bf16.msra.mxu0 %v2041
        %2089 = vmatpush.bf16.msra.mxu0 %v2040
        %2090 = vmatmul.bf16.gmra.mxu0 %v2046
        %v2091 = vpop.f32.mrf.mxu0
        %v2092 = vadd.f32 %v2028, %v2091
        %v2093 = vpop.f32.mrf.mxu0
        %v2094 = vadd.f32 %v2028, %v2093
        %2095 = vmatmul.bf16.gmra.mxu0 %v2048
        %v2096 = vpop.f32.mrf.mxu0
        %v2097 = vadd.f32 %v2028, %v2096
        %v2098 = vpop.f32.mrf.mxu0
        %v2099 = vadd.f32 %v2028, %v2098
        %2100 = vmatmul.bf16.gmra.mxu0 %v2050
        %v2101 = vpop.f32.mrf.mxu0
        %v2102 = vadd.f32 %v2028, %v2101
        %v2103 = vpop.f32.mrf.mxu0
        %v2104 = vadd.f32 %v2028, %v2103
        %2105 = vmatmul.bf16.gmra.mxu0 %v2052
        %v2106 = vpop.f32.mrf.mxu0
        %v2107 = vadd.f32 %v2028, %v2106
        %v2108 = vpop.f32.mrf.mxu0
        %v2109 = vadd.f32 %v2028, %v2108
        %2110 = vmatmul.bf16.gmra.mxu0 %v2054
        %v2111 = vpop.f32.mrf.mxu0
        %v2112 = vadd.f32 %v2028, %v2111
        %v2113 = vpop.f32.mrf.mxu0
        %v2114 = vadd.f32 %v2028, %v2113
        %2115 = vmatmul.bf16.gmra.mxu0 %v2056
        %v2116 = vpop.f32.mrf.mxu0
        %v2117 = vadd.f32 %v2028, %v2116
        %v2118 = vpop.f32.mrf.mxu0
        %v2119 = vadd.f32 %v2028, %v2118
        %2120 = vmatmul.bf16.gmra.mxu0 %v2058
        %v2121 = vpop.f32.mrf.mxu0
        %v2122 = vadd.f32 %v2028, %v2121
        %v2123 = vpop.f32.mrf.mxu0
        %v2124 = vadd.f32 %v2028, %v2123
        %2125 = vmatmul.bf16.gmra.mxu0 %v2060
        %v2126 = vpop.f32.mrf.mxu0
        %v2127 = vadd.f32 %v2028, %v2126
        %v2128 = vpop.f32.mrf.mxu0
        %v2129 = vadd.f32 %v2028, %v2128
        %2130 = vmatmul.bf16.gmra.mxu0 %v2062
        %v2131 = vpop.f32.mrf.mxu0
        %v2132 = vadd.f32 %v2028, %v2131
        %v2133 = vpop.f32.mrf.mxu0
        %v2134 = vadd.f32 %v2028, %v2133
        %2135 = vmatmul.bf16.gmra.mxu0 %v2064
        %v2136 = vpop.f32.mrf.mxu0
        %v2137 = vadd.f32 %v2028, %v2136
        %v2138 = vpop.f32.mrf.mxu0
        %v2139 = vadd.f32 %v2028, %v2138
        %2140 = vmatmul.bf16.gmra.mxu0 %v2066
        %v2141 = vpop.f32.mrf.mxu0
        %v2142 = vadd.f32 %v2028, %v2141
        %v2143 = vpop.f32.mrf.mxu0
        %v2144 = vadd.f32 %v2028, %v2143
        %2145 = vmatmul.bf16.gmra.mxu0 %v2068
        %v2146 = vpop.f32.mrf.mxu0
        %v2147 = vadd.f32 %v2028, %v2146
        %v2148 = vpop.f32.mrf.mxu0
        %v2149 = vadd.f32 %v2028, %v2148
        %2150 = vmatmul.bf16.gmra.mxu0 %v2070
        %v2151 = vpop.f32.mrf.mxu0
        %v2152 = vadd.f32 %v2028, %v2151
        %v2153 = vpop.f32.mrf.mxu0
        %v2154 = vadd.f32 %v2028, %v2153
        %2155 = vmatmul.bf16.gmra.mxu0 %v2072
        %v2156 = vpop.f32.mrf.mxu0
        %v2157 = vadd.f32 %v2028, %v2156
        %v2158 = vpop.f32.mrf.mxu0
        %v2159 = vadd.f32 %v2028, %v2158
        %2160 = vmatmul.bf16.gmra.mxu0 %v2074
        %v2161 = vpop.f32.mrf.mxu0
        %v2162 = vadd.f32 %v2028, %v2161
        %v2163 = vpop.f32.mrf.mxu0
        %v2164 = vadd.f32 %v2028, %v2163
        %2165 = vmatmul.bf16.gmra.mxu0 %v2076
        %v2166 = vpop.f32.mrf.mxu0
        %v2167 = vadd.f32 %v2028, %v2166
        %v2168 = vpop.f32.mrf.mxu0
        %v2169 = vadd.f32 %v2028, %v2168
        %2170 = vdwg.mxu0
        %v2171 = vmul.f32 %v2092, 0.5
        %v2172 = vmul.f32 %v2094, 0.5
        %v2173 = vmul.f32 %v2097, 0.5
        %v2174 = vmul.f32 %v2099, 0.5
        %v2175 = vmul.f32 %v2102, 0.5
        %v2176 = vmul.f32 %v2104, 0.5
        %v2177 = vmul.f32 %v2107, 0.5
        %v2178 = vmul.f32 %v2109, 0.5
        %v2179 = vmul.f32 %v2112, 0.5
        %v2180 = vmul.f32 %v2114, 0.5
        %v2181 = vmul.f32 %v2117, 0.5
        %v2182 = vmul.f32 %v2119, 0.5
        %v2183 = vmul.f32 %v2122, 0.5
        %v2184 = vmul.f32 %v2124, 0.5
        %v2185 = vmul.f32 %v2127, 0.5
        %v2186 = vmul.f32 %v2129, 0.5
        %v2187 = vmul.f32 %v2132, 0.5
        %v2188 = vmul.f32 %v2134, 0.5
        %v2189 = vmul.f32 %v2137, 0.5
        %v2190 = vmul.f32 %v2139, 0.5
        %v2191 = vmul.f32 %v2142, 0.5
        %v2192 = vmul.f32 %v2144, 0.5
        %v2193 = vmul.f32 %v2147, 0.5
        %v2194 = vmul.f32 %v2149, 0.5
        %v2195 = vmul.f32 %v2152, 0.5
        %v2196 = vmul.f32 %v2154, 0.5
        %v2197 = vmul.f32 %v2157, 0.5
        %v2198 = vmul.f32 %v2159, 0.5
        %v2199 = vmul.f32 %v2162, 0.5
        %v2200 = vmul.f32 %v2164, 0.5
        %v2201 = vmul.f32 %v2167, 0.5
        %v2202 = vmul.f32 %v2169, 0.5
        %v2203 = vmul.f32 %v2092, %v2092
        %v2204 = vmul.f32 %v2094, %v2094
        %v2205 = vmul.f32 %v2097, %v2097
        %v2206 = vmul.f32 %v2099, %v2099
        %v2207 = vmul.f32 %v2102, %v2102
        %v2208 = vmul.f32 %v2104, %v2104
        %v2209 = vmul.f32 %v2107, %v2107
        %v2210 = vmul.f32 %v2109, %v2109
        %v2211 = vmul.f32 %v2112, %v2112
        %v2212 = vmul.f32 %v2114, %v2114
        %v2213 = vmul.f32 %v2117, %v2117
        %v2214 = vmul.f32 %v2119, %v2119
        %v2215 = vmul.f32 %v2122, %v2122
        %v2216 = vmul.f32 %v2124, %v2124
        %v2217 = vmul.f32 %v2127, %v2127
        %v2218 = vmul.f32 %v2129, %v2129
        %v2219 = vmul.f32 %v2132, %v2132
        %v2220 = vmul.f32 %v2134, %v2134
        %v2221 = vmul.f32 %v2137, %v2137
        %v2222 = vmul.f32 %v2139, %v2139
        %v2223 = vmul.f32 %v2142, %v2142
        %v2224 = vmul.f32 %v2144, %v2144
        %v2225 = vmul.f32 %v2147, %v2147
        %v2226 = vmul.f32 %v2149, %v2149
        %v2227 = vmul.f32 %v2152, %v2152
        %v2228 = vmul.f32 %v2154, %v2154
        %v2229 = vmul.f32 %v2157, %v2157
        %v2230 = vmul.f32 %v2159, %v2159
        %v2231 = vmul.f32 %v2162, %v2162
        %v2232 = vmul.f32 %v2164, %v2164
        %v2233 = vmul.f32 %v2167, %v2167
        %v2234 = vmul.f32 %v2169, %v2169
        %v2235 = vmul.f32 %v2203, %v2092
        %v2236 = vmul.f32 %v2204, %v2094
        %v2237 = vmul.f32 %v2205, %v2097
        %v2238 = vmul.f32 %v2206, %v2099
        %v2239 = vmul.f32 %v2207, %v2102
        %v2240 = vmul.f32 %v2208, %v2104
        %v2241 = vmul.f32 %v2209, %v2107
        %v2242 = vmul.f32 %v2210, %v2109
        %v2243 = vmul.f32 %v2211, %v2112
        %v2244 = vmul.f32 %v2212, %v2114
        %v2245 = vmul.f32 %v2213, %v2117
        %v2246 = vmul.f32 %v2214, %v2119
        %v2247 = vmul.f32 %v2215, %v2122
        %v2248 = vmul.f32 %v2216, %v2124
        %v2249 = vmul.f32 %v2217, %v2127
        %v2250 = vmul.f32 %v2218, %v2129
        %v2251 = vmul.f32 %v2219, %v2132
        %v2252 = vmul.f32 %v2220, %v2134
        %v2253 = vmul.f32 %v2221, %v2137
        %v2254 = vmul.f32 %v2222, %v2139
        %v2255 = vmul.f32 %v2223, %v2142
        %v2256 = vmul.f32 %v2224, %v2144
        %v2257 = vmul.f32 %v2225, %v2147
        %v2258 = vmul.f32 %v2226, %v2149
        %v2259 = vmul.f32 %v2227, %v2152
        %v2260 = vmul.f32 %v2228, %v2154
        %v2261 = vmul.f32 %v2229, %v2157
        %v2262 = vmul.f32 %v2230, %v2159
        %v2263 = vmul.f32 %v2231, %v2162
        %v2264 = vmul.f32 %v2232, %v2164
        %v2265 = vmul.f32 %v2233, %v2167
        %v2266 = vmul.f32 %v2234, %v2169
        %v2267 = vmul.f32 %v2235, 0.044715
        %v2268 = vmul.f32 %v2236, 0.044715
        %v2269 = vmul.f32 %v2237, 0.044715
        %v2270 = vmul.f32 %v2238, 0.044715
        %v2271 = vmul.f32 %v2239, 0.044715
        %v2272 = vmul.f32 %v2240, 0.044715
        %v2273 = vmul.f32 %v2241, 0.044715
        %v2274 = vmul.f32 %v2242, 0.044715
        %v2275 = vmul.f32 %v2243, 0.044715
        %v2276 = vmul.f32 %v2244, 0.044715
        %v2277 = vmul.f32 %v2245, 0.044715
        %v2278 = vmul.f32 %v2246, 0.044715
        %v2279 = vmul.f32 %v2247, 0.044715
        %v2280 = vmul.f32 %v2248, 0.044715
        %v2281 = vmul.f32 %v2249, 0.044715
        %v2282 = vmul.f32 %v2250, 0.044715
        %v2283 = vmul.f32 %v2251, 0.044715
        %v2284 = vmul.f32 %v2252, 0.044715
        %v2285 = vmul.f32 %v2253, 0.044715
        %v2286 = vmul.f32 %v2254, 0.044715
        %v2287 = vmul.f32 %v2255, 0.044715
        %v2288 = vmul.f32 %v2256, 0.044715
        %v2289 = vmul.f32 %v2257, 0.044715
        %v2290 = vmul.f32 %v2258, 0.044715
        %v2291 = vmul.f32 %v2259, 0.044715
        %v2292 = vmul.f32 %v2260, 0.044715
        %v2293 = vmul.f32 %v2261, 0.044715
        %v2294 = vmul.f32 %v2262, 0.044715
        %v2295 = vmul.f32 %v2263, 0.044715
        %v2296 = vmul.f32 %v2264, 0.044715
        %v2297 = vmul.f32 %v2265, 0.044715
        %v2298 = vmul.f32 %v2266, 0.044715
        %v2299 = vadd.f32 %v2092, %v2267
        %v2300 = vadd.f32 %v2094, %v2268
        %v2301 = vadd.f32 %v2097, %v2269
        %v2302 = vadd.f32 %v2099, %v2270
        %v2303 = vadd.f32 %v2102, %v2271
        %v2304 = vadd.f32 %v2104, %v2272
        %v2305 = vadd.f32 %v2107, %v2273
        %v2306 = vadd.f32 %v2109, %v2274
        %v2307 = vadd.f32 %v2112, %v2275
        %v2308 = vadd.f32 %v2114, %v2276
        %v2309 = vadd.f32 %v2117, %v2277
        %v2310 = vadd.f32 %v2119, %v2278
        %v2311 = vadd.f32 %v2122, %v2279
        %v2312 = vadd.f32 %v2124, %v2280
        %v2313 = vadd.f32 %v2127, %v2281
        %v2314 = vadd.f32 %v2129, %v2282
        %v2315 = vadd.f32 %v2132, %v2283
        %v2316 = vadd.f32 %v2134, %v2284
        %v2317 = vadd.f32 %v2137, %v2285
        %v2318 = vadd.f32 %v2139, %v2286
        %v2319 = vadd.f32 %v2142, %v2287
        %v2320 = vadd.f32 %v2144, %v2288
        %v2321 = vadd.f32 %v2147, %v2289
        %v2322 = vadd.f32 %v2149, %v2290
        %v2323 = vadd.f32 %v2152, %v2291
        %v2324 = vadd.f32 %v2154, %v2292
        %v2325 = vadd.f32 %v2157, %v2293
        %v2326 = vadd.f32 %v2159, %v2294
        %v2327 = vadd.f32 %v2162, %v2295
        %v2328 = vadd.f32 %v2164, %v2296
        %v2329 = vadd.f32 %v2167, %v2297
        %v2330 = vadd.f32 %v2169, %v2298
        %v2331 = vmul.f32 %v2299, 0.7978846
        %v2332 = vmul.f32 %v2300, 0.7978846
        %v2333 = vmul.f32 %v2301, 0.7978846
        %v2334 = vmul.f32 %v2302, 0.7978846
        %v2335 = vmul.f32 %v2303, 0.7978846
        %v2336 = vmul.f32 %v2304, 0.7978846
        %v2337 = vmul.f32 %v2305, 0.7978846
        %v2338 = vmul.f32 %v2306, 0.7978846
        %v2339 = vmul.f32 %v2307, 0.7978846
        %v2340 = vmul.f32 %v2308, 0.7978846
        %v2341 = vmul.f32 %v2309, 0.7978846
        %v2342 = vmul.f32 %v2310, 0.7978846
        %v2343 = vmul.f32 %v2311, 0.7978846
        %v2344 = vmul.f32 %v2312, 0.7978846
        %v2345 = vmul.f32 %v2313, 0.7978846
        %v2346 = vmul.f32 %v2314, 0.7978846
        %v2347 = vmul.f32 %v2315, 0.7978846
        %v2348 = vmul.f32 %v2316, 0.7978846
        %v2349 = vmul.f32 %v2317, 0.7978846
        %v2350 = vmul.f32 %v2318, 0.7978846
        %v2351 = vmul.f32 %v2319, 0.7978846
        %v2352 = vmul.f32 %v2320, 0.7978846
        %v2353 = vmul.f32 %v2321, 0.7978846
        %v2354 = vmul.f32 %v2322, 0.7978846
        %v2355 = vmul.f32 %v2323, 0.7978846
        %v2356 = vmul.f32 %v2324, 0.7978846
        %v2357 = vmul.f32 %v2325, 0.7978846
        %v2358 = vmul.f32 %v2326, 0.7978846
        %v2359 = vmul.f32 %v2327, 0.7978846
        %v2360 = vmul.f32 %v2328, 0.7978846
        %v2361 = vmul.f32 %v2329, 0.7978846
        %v2362 = vmul.f32 %v2330, 0.7978846
        %v2363 = vtanh.pop %v2331
        %v2364 = vtanh.pop %v2332
        %v2365 = vtanh.pop %v2333
        %v2366 = vtanh.pop %v2334
        %v2367 = vtanh.pop %v2335
        %v2368 = vtanh.pop %v2336
        %v2369 = vtanh.pop %v2337
        %v2370 = vtanh.pop %v2338
        %v2371 = vtanh.pop %v2339
        %v2372 = vtanh.pop %v2340
        %v2373 = vtanh.pop %v2341
        %v2374 = vtanh.pop %v2342
        %v2375 = vtanh.pop %v2343
        %v2376 = vtanh.pop %v2344
        %v2377 = vtanh.pop %v2345
        %v2378 = vtanh.pop %v2346
        %v2379 = vtanh.pop %v2347
        %v2380 = vtanh.pop %v2348
        %v2381 = vtanh.pop %v2349
        %v2382 = vtanh.pop %v2350
        %v2383 = vtanh.pop %v2351
        %v2384 = vtanh.pop %v2352
        %v2385 = vtanh.pop %v2353
        %v2386 = vtanh.pop %v2354
        %v2387 = vtanh.pop %v2355
        %v2388 = vtanh.pop %v2356
        %v2389 = vtanh.pop %v2357
        %v2390 = vtanh.pop %v2358
        %v2391 = vtanh.pop %v2359
        %v2392 = vtanh.pop %v2360
        %v2393 = vtanh.pop %v2361
        %v2394 = vtanh.pop %v2362
        %v2395 = vadd.f32 %v2363, 1.0
        %v2396 = vadd.f32 %v2364, 1.0
        %v2397 = vadd.f32 %v2365, 1.0
        %v2398 = vadd.f32 %v2366, 1.0
        %v2399 = vadd.f32 %v2367, 1.0
        %v2400 = vadd.f32 %v2368, 1.0
        %v2401 = vadd.f32 %v2369, 1.0
        %v2402 = vadd.f32 %v2370, 1.0
        %v2403 = vadd.f32 %v2371, 1.0
        %v2404 = vadd.f32 %v2372, 1.0
        %v2405 = vadd.f32 %v2373, 1.0
        %v2406 = vadd.f32 %v2374, 1.0
        %v2407 = vadd.f32 %v2375, 1.0
        %v2408 = vadd.f32 %v2376, 1.0
        %v2409 = vadd.f32 %v2377, 1.0
        %v2410 = vadd.f32 %v2378, 1.0
        %v2411 = vadd.f32 %v2379, 1.0
        %v2412 = vadd.f32 %v2380, 1.0
        %v2413 = vadd.f32 %v2381, 1.0
        %v2414 = vadd.f32 %v2382, 1.0
        %v2415 = vadd.f32 %v2383, 1.0
        %v2416 = vadd.f32 %v2384, 1.0
        %v2417 = vadd.f32 %v2385, 1.0
        %v2418 = vadd.f32 %v2386, 1.0
        %v2419 = vadd.f32 %v2387, 1.0
        %v2420 = vadd.f32 %v2388, 1.0
        %v2421 = vadd.f32 %v2389, 1.0
        %v2422 = vadd.f32 %v2390, 1.0
        %v2423 = vadd.f32 %v2391, 1.0
        %v2424 = vadd.f32 %v2392, 1.0
        %v2425 = vadd.f32 %v2393, 1.0
        %v2426 = vadd.f32 %v2394, 1.0
        %v2427 = vmul.f32 %v2171, %v2395
        %v2428 = vmul.f32 %v2172, %v2396
        %v2429 = vmul.f32 %v2173, %v2397
        %v2430 = vmul.f32 %v2174, %v2398
        %v2431 = vmul.f32 %v2175, %v2399
        %v2432 = vmul.f32 %v2176, %v2400
        %v2433 = vmul.f32 %v2177, %v2401
        %v2434 = vmul.f32 %v2178, %v2402
        %v2435 = vmul.f32 %v2179, %v2403
        %v2436 = vmul.f32 %v2180, %v2404
        %v2437 = vmul.f32 %v2181, %v2405
        %v2438 = vmul.f32 %v2182, %v2406
        %v2439 = vmul.f32 %v2183, %v2407
        %v2440 = vmul.f32 %v2184, %v2408
        %v2441 = vmul.f32 %v2185, %v2409
        %v2442 = vmul.f32 %v2186, %v2410
        %v2443 = vmul.f32 %v2187, %v2411
        %v2444 = vmul.f32 %v2188, %v2412
        %v2445 = vmul.f32 %v2189, %v2413
        %v2446 = vmul.f32 %v2190, %v2414
        %v2447 = vmul.f32 %v2191, %v2415
        %v2448 = vmul.f32 %v2192, %v2416
        %v2449 = vmul.f32 %v2193, %v2417
        %v2450 = vmul.f32 %v2194, %v2418
        %v2451 = vmul.f32 %v2195, %v2419
        %v2452 = vmul.f32 %v2196, %v2420
        %v2453 = vmul.f32 %v2197, %v2421
        %v2454 = vmul.f32 %v2198, %v2422
        %v2455 = vmul.f32 %v2199, %v2423
        %v2456 = vmul.f32 %v2200, %v2424
        %v2457 = vmul.f32 %v2201, %v2425
        %v2458 = vmul.f32 %v2202, %v2426
        %v2459 = vld [vmem:[%s3] sm:$0x3]
        %v2460 = vpack.c.bf16 %v2428, %v2427
        %v2461 = vpack.c.bf16 %v2430, %v2429
        %v2462 = vpack.c.bf16 %v2432, %v2431
        %v2463 = vpack.c.bf16 %v2434, %v2433
        %v2464 = vpack.c.bf16 %v2436, %v2435
        %v2465 = vpack.c.bf16 %v2438, %v2437
        %v2466 = vpack.c.bf16 %v2440, %v2439
        %v2467 = vpack.c.bf16 %v2442, %v2441
        %v2468 = vpack.c.bf16 %v2444, %v2443
        %v2469 = vpack.c.bf16 %v2446, %v2445
        %v2470 = vpack.c.bf16 %v2448, %v2447
        %v2471 = vpack.c.bf16 %v2450, %v2449
        %v2472 = vpack.c.bf16 %v2452, %v2451
        %v2473 = vpack.c.bf16 %v2454, %v2453
        %v2474 = vpack.c.bf16 %v2456, %v2455
        %v2475 = vpack.c.bf16 %v2458, %v2457
        %v2476 = vld [vmem:[%s4] sm:$0xf]
        %2478 = vset.pattern.permute.xlu0 0
        %2479 = vperm.xlu0 %2478, %v2476
        %v2480 = vpop.permute.xlu0 %2479
        %v2483 = vsel %vm1988, %v2459, 0
        %v2486 = vsel %vm1988, %v2460, 0
        %v2489 = vsel %vm1988, %v2461, 0
        %v2492 = vsel %vm1988, %v2462, 0
        %v2495 = vsel %vm1988, %v2463, 0
        %v2498 = vsel %vm1988, %v2464, 0
        %v2501 = vsel %vm1988, %v2465, 0
        %v2504 = vsel %vm1988, %v2466, 0
        %v2507 = vsel %vm1988, %v2467, 0
        %v2510 = vsel %vm1988, %v2468, 0
        %v2513 = vsel %vm1988, %v2469, 0
        %v2516 = vsel %vm1988, %v2470, 0
        %v2519 = vsel %vm1988, %v2471, 0
        %v2522 = vsel %vm1988, %v2472, 0
        %v2525 = vsel %vm1988, %v2473, 0
        %v2528 = vsel %vm1988, %v2474, 0
        %v2531 = vsel %vm1988, %v2475, 0
        %2533 = vmatpush.bf16.xpose.msra.mxu0 %v2507
        %2534 = vmatpush.bf16.xpose.msra.mxu0 %v2504
        %2535 = vmatpush.bf16.xpose.msra.mxu0 %v2501
        %2536 = vmatpush.bf16.xpose.msra.mxu0 %v2498
        %2537 = vmatpush.bf16.xpose.msra.mxu0 %v2495
        %2538 = vmatpush.bf16.xpose.msra.mxu0 %v2492
        %2539 = vmatpush.bf16.xpose.msra.mxu0 %v2489
        %2540 = vmatpush.bf16.xpose.msra.mxu0 %v2486
        %2541 = vmatmul.bf16.gmra.mxu0 %v2483
        %v2542 = vpop.f32.mrf.mxu0
        %v2543 = vadd.f32 %v2480, %v2542
        %v2544 = vpop.f32.mrf.mxu0
        %2545 = vdwg.mxu0
        %2546 = vmatpush.bf16.xpose.msra.mxu0 %v2531
        %2547 = vmatpush.bf16.xpose.msra.mxu0 %v2528
        %2548 = vmatpush.bf16.xpose.msra.mxu0 %v2525
        %2549 = vmatpush.bf16.xpose.msra.mxu0 %v2522
        %2550 = vmatpush.bf16.xpose.msra.mxu0 %v2519
        %2551 = vmatpush.bf16.xpose.msra.mxu0 %v2516
        %2552 = vmatpush.bf16.xpose.msra.mxu0 %v2513
        %2553 = vmatpush.bf16.xpose.msra.mxu0 %v2510
        %2554 = vmatmul.bf16.gmra.mxu0 %v2483
        %v2555 = vpop.f32.mrf.mxu0
        %v2556 = vadd.f32 %v2480, %v2555
        %v2557 = vpop.f32.mrf.mxu0
        %2558 = vdwg.mxu0
        %vm2559 = vcmp.ge.f32.partialorder %v2543, 0.0
        %vm2560 = vcmp.ge.f32.partialorder %v2556, 0.0
        %v2561 = vsel %vm2559, 1, 0
        %v2562 = vsel %vm2560, 1, 0
        %v2563 = vcvt.s32.f32 %v2561
        %v2564 = vcvt.s32.f32 %v2562
        %v2565 = vpack.c.bf16 %v2564, %v2563
        %v2567 = vrot.slane %v2565, 2
        %v2570 = vsel %vm2078, %v2565, %v2567
        %2572 = vst [vmem:[%s231] sm:$0xf] %v2570
        %s2573 = sand.u32 %s151, 1
        %s2574 = scalar_lea.sflag [#allocation3], %s2573
        %s2575 = sand.u32 %s151, 1
        %s2576 = smul.addr %s2575, 4
        %s2577 = scalar_lea.vmem [#allocation2], %s2576
        // Predicated region
        $region41: #{tpu_custom_call.1} parent=39 // pred_check
          %p2578 = pneg %p161
        $region42: #{tpu_custom_call.1} parent=39 // pred_check_branch
          %2580 = sbr.rel (%p2578) target = $region44
        $region43: #{tpu_custom_call.1} parent=39 // pred_region
          %s2581 = sadd.s32 %s23, %s24
          %2583 = vsyncadd %s2574, 0
          %s2584 = smul.addr %s2581, 2
          %s2585 = smul.addr %s2584, 2
          %s2586 = scalar_lea.hbm %s5, %s2585
          %s2588 = sshll.u32 %s2577, 4
          %s2589 = int_to_ptr.vmem [resolvable:$true] %s2588
          %s2590 = sshll.u32 %s2586, 4
          %s2591 = int_to_ptr.hbm [resolvable:$true] %s2590
          %2593 = dma.vmem_to_hbm [thread:$0]  %s2589, 64, %s2591, %s2574
        $region44: #{tpu_custom_call.1} parent=39 // pred_fallthru
          _
      $region40: #{tpu_custom_call.1} parent=5 // pred_fallthru
        _
      %p2594 = scmp.le.s32.totalorder 2, %s14
      // Predicated region
      $region45: #{tpu_custom_call.1} parent=5 // pred_check
        %p2595 = pneg %p2594
      $region46: #{tpu_custom_call.1} parent=5 // pred_check_branch
        %2597 = sbr.rel (%p2595) target = $region48
      $region47: #{tpu_custom_call.1} parent=5 // pred_region
        %s2598 = ssub.s32 %s14, 2
        // Predicated region
        $region49: #{tpu_custom_call.1} parent=47 // pred_check
          %p2599 = pneg %p167
        $region50: #{tpu_custom_call.1} parent=47 // pred_check_branch
          %2601 = sbr.rel (%p2599) target = $region52
        $region51: #{tpu_custom_call.1} parent=47 // pred_region
          %s2602 = sand.u32 %s152, 1
          %s2603 = scalar_lea.sflag [#allocation3], %s2602
          %s2604 = sand.u32 %s152, 1
          %s2605 = smul.addr %s2604, 4
          %s2606 = scalar_lea.vmem [#allocation2], %s2605
          %2608 = dma.done %s2603, 64
        $region52: #{tpu_custom_call.1} parent=47 // pred_fallthru
          _
      $region48: #{tpu_custom_call.1} parent=5 // pred_fallthru
        _
    $region6: #{tpu_custom_call.1} parent=1 // loop_footer
      %s18 = sadd.s32 1, %s14
    $region7: #{tpu_custom_call.1} parent=1 // loop_footer_branch
      %13 = sbr.rel target = $region3
    $region8: #{tpu_custom_call.1} parent=1 // loop_exit
      _
    %2609 = vsyncpa [#allocation3], 1
    %s2610 = scalar_lea.sflag [#allocation3], 1
    %2611 = vsyncpa %s2610, 1

</llo_original>
